<compile_context>
chip_gen: v7x
topology: tpu7x:2x2x1
jax: 0.10.0
libtpu: 0.0.40
codegen_flags: <defaults>
</compile_context>

<pallas_src>
import functools
import math

import numpy as np
import jax
import jax.numpy as jnp
from jax import lax
from jax.experimental import pallas as pl
from jax.experimental.pallas import tpu as pltpu


# ----------------------------------------------------------------------------
# Fused kernel
# ----------------------------------------------------------------------------
def _octave_fused_kernel(x_ref, wh_ref, wlo_ref, pool_ref, emb_ref,
                         up_ref, crh_ref, crl_ref, bh_ref, bl_ref,
                         oh_ref, ol_ref, *,
                         B, C, ch_in, ch_out, cl_out, ch_out_p, cl_out_p,
                         Wp, Wpl, pad_h, pad_l):
    f32 = jnp.float32
    bf16 = jnp.bfloat16
    lo_blk = ch_out_p + 2 * cl_out_p

    def tap_sum(y, rows, stride, width):
        # y: (9*rows, width); per-tap block is an aligned sublane slice, the
        # tap shift is a static lane roll (XLU) -- no unaligned extracts.
        acc = None
        for t in range(9):
            s = (t // 3) * stride + (t % 3)
            blk = y[t * rows:(t + 1) * rows, :]
            if s:
                blk = pltpu.roll(blk, shift=width - s, axis=1)
            acc = blk if acc is None else acc + blk
        return acc

    X = x_ref[...]                                                # (B*C, H*W) bf16
    # Merged 2x2 avg-pool + zero-pad embed of ALL channels of the whole block.
    XP = jnp.dot(X, pool_ref[...], preferred_element_type=f32).astype(bf16)

    for b in range(B):
        r0 = b * C
        xh = X[r0:r0 + ch_in, :]                                  # (64, H*W)
        xp = XP[r0:r0 + C, :]                                     # (256, pad_l)

        # high->high: conv first (K=64, compact lanes), then constant pad-embed.
        y_h = jnp.dot(wh_ref[...], xh, preferred_element_type=f32)      # (9*chp, HW)
        y_hp = jnp.dot(y_h, emb_ref[...], preferred_element_type=f32)   # (9*chp, pad_h)

        # pooled-input convs (l2h | l2l | h2l merged), full K=256 depth.
        y_lo = jnp.dot(wlo_ref[...], xp, preferred_element_type=f32)    # (9*lo_blk, pad_l)

        # 9-tap sums.
        acc_h = tap_sum(y_hp, ch_out_p, Wp, pad_h)                # (chp, pad_h)
        acc_lo = tap_sum(y_lo, lo_blk, Wpl, pad_l)                # (lo_blk, pad_l)

        # f32 epilogue: bilinear-up+crop, crop, channel adds, biases.
        l2h_up = jnp.dot(acc_lo[0:ch_out_p, :], up_ref[...],
                         preferred_element_type=f32)              # (chp, H*W)
        h2h_c = jnp.dot(acc_h, crh_ref[...], preferred_element_type=f32)
        oh_ref[b] = (h2h_c + l2h_up)[:ch_out, :] + bh_ref[...]

        sum_l = (acc_lo[ch_out_p:ch_out_p + cl_out_p, :]
                 + acc_lo[ch_out_p + cl_out_p:ch_out_p + 2 * cl_out_p, :])
        ol_ref[b] = (jnp.dot(sum_l, crl_ref[...],
                             preferred_element_type=f32)[:cl_out, :]
                     + bl_ref[...])


# ----------------------------------------------------------------------------
# Constant spatial operators (numpy, built once per shape at trace time).
# ----------------------------------------------------------------------------
def _pool_pad_matrix(H, W, width):
    # input pixel (h, w) -> 0.25 at padded-low-frame position (h//2+1, w//2+1)
    Wpl = W // 2 + 2
    P = np.zeros((H * W, width), np.float32)
    for h in range(H):
        for w in range(W):
            P[h * W + w, (h // 2 + 1) * Wpl + (w // 2 + 1)] = 0.25
    return P


def _embed_matrix(H, W, width):
    # input pixel (h, w) -> 1.0 at padded-high-frame position (h+1, w+1)
    Wp = W + 2
    E = np.zeros((H * W, width), np.float32)
    for h in range(H):
        for w in range(W):
            E[h * W + w, (h + 1) * Wp + (w + 1)] = 1.0
    return E


def _crop_matrix(Hc, Wc, wide_stride, width):
    # wide-frame conv anchor h*wide_stride + w  ->  compact h*Wc + w
    Cm = np.zeros((width, Hc * Wc), np.float32)
    for h in range(Hc):
        for w in range(Wc):
            Cm[h * wide_stride + w, h * Wc + w] = 1.0
    return Cm


def _upsample_crop_matrix(H, W, width_lo):
    # low-conv anchor hl*(Wl+2)+wl -> bilinear x2 (align_corners=True) directly
    # at the compact high-res position ho*W + wo (upsample + crop composed).
    Hl, Wl = H // 2, W // 2
    Wpl = Wl + 2
    U = np.zeros((width_lo, H * W), np.float32)

    def coords(n_in, n_out):
        pos = np.arange(n_out, dtype=np.float64) * (n_in - 1) / (n_out - 1)
        lo = np.clip(np.floor(pos).astype(np.int64), 0, n_in - 2)
        return lo, pos - lo

    ylo, fy = coords(Hl, H)
    xlo, fx = coords(Wl, W)
    for ho in range(H):
        for wo in range(W):
            qo = ho * W + wo
            for yy, cy in ((ylo[ho], 1.0 - fy[ho]), (ylo[ho] + 1, fy[ho])):
                for xx, cx in ((xlo[wo], 1.0 - fx[wo]), (xlo[wo] + 1, fx[wo])):
                    U[int(yy) * Wpl + int(xx), qo] += cy * cx
    return U


# ----------------------------------------------------------------------------
# Conv weight stacking (tap-major, Cout zero-padded to 8-row blocks).
# ----------------------------------------------------------------------------
def _stack_high_taps(w_hwio, coutp):
    cin, cout = w_hwio.shape[2], w_hwio.shape[3]
    blocks = []
    for dy in range(3):
        for dx in range(3):
            blk = jnp.zeros((coutp, cin), jnp.float32)
            blk = blk.at[:cout, :].set(jnp.transpose(w_hwio[dy, dx]))
            blocks.append(blk)
    return jnp.concatenate(blocks, axis=0)


def _stack_pooled_taps(w_l2h, w_l2l, w_h2l, ch_in, ch_out, cl_out,
                       ch_out_p, cl_out_p):
    # per-tap block rows: [ l2h | pad | l2l | pad | h2l | pad ]; columns are the
    # pooled input channels (high 0..63 | low 64..255).
    cl_in = w_l2l.shape[2]
    cols = ch_in + cl_in
    lo_blk = ch_out_p + 2 * cl_out_p
    blocks = []
    for dy in range(3):
        for dx in range(3):
            blk = jnp.zeros((lo_blk, cols), jnp.float32)
            blk = blk.at[:ch_out, ch_in:].set(jnp.transpose(w_l2h[dy, dx]))
            blk = blk.at[ch_out_p:ch_out_p + cl_out, ch_in:].set(
                jnp.transpose(w_l2l[dy, dx]))
            blk = blk.at[ch_out_p + cl_out_p:ch_out_p + cl_out_p + cl_out,
                         :ch_in].set(jnp.transpose(w_h2l[dy, dx]))
            blocks.append(blk)
    return jnp.concatenate(blocks, axis=0)


def _round_up(x, m):
    return (x + m - 1) // m * m


def _pick_batch_block(n):
    # Largest block in {8,4,2,1} that divides N while keeping >=2 grid steps
    # (amortize per-step overhead; keep both v7x TensorCores busy).
    for b in (8, 4, 2, 1):
        if n % b == 0 and n // b >= 2:
            return b
    return n


# ----------------------------------------------------------------------------
# Public forward: NCHW in, (NCHW high, NCHW low) out -- exact module semantics.
# ----------------------------------------------------------------------------
@jax.jit
def octave_conv2_forward(x_nchw, params):
    N, C, H, W = x_nchw.shape
    ch_in = params["h2h_w"].shape[2]
    cl_in = params["l2l_w"].shape[2]
    ch_out = params["h2h_w"].shape[3]
    cl_out = params["l2l_w"].shape[3]
    # The torch forward hard-codes the high/low split at channel 64.
    assert ch_in == 64 and C == ch_in + cl_in, (
        "OctaveConv2.forward hard-codes the split at channel 64")
    assert H % 2 == 0 and W % 2 == 0 and H >= 4 and W >= 4

    Hl, Wl = H // 2, W // 2
    Wp, Wpl = W + 2, Wl + 2
    HW, HWl = H * W, Hl * Wl
    # Padded flat-frame widths: output anchor range + max tap shift, rounded up
    # to a multiple of 128 so tap shifts are clean full-vreg lane rolls.
    pad_h = _round_up((H - 1) * Wp + (W - 1) + 2 * Wp + 2 + 1, 128)
    pad_l = _round_up((Hl - 1) * Wpl + (Wl - 1) + 2 * Wpl + 2 + 1, 128)
    ch_out_p = _round_up(ch_out, 8)
    cl_out_p = _round_up(cl_out, 8)

    bf16, f32 = jnp.bfloat16, jnp.float32
    B = _pick_batch_block(N)

    # NCHW -> one (N*C, H*W) slab: pure reshape, no transpose, no pre-padding.
    x2d = x_nchw.reshape(N * C, HW).astype(bf16)

    # Stacked conv weights + combined biases.
    w_h2h = _stack_high_taps(params["h2h_w"], ch_out_p).astype(bf16)
    w_low = _stack_pooled_taps(params["l2h_w"], params["l2l_w"],
                               params["h2l_w"], ch_in, ch_out, cl_out,
                               ch_out_p, cl_out_p).astype(bf16)
    b_h = (params["h2h_b"] + params["l2h_b"]).reshape(ch_out, 1).astype(f32)
    b_l = (params["l2l_b"] + params["h2l_b"]).reshape(cl_out, 1).astype(f32)

    # Constant spatial operators.
    pool = jnp.asarray(_pool_pad_matrix(H, W, pad_l), bf16)       # (HW, pad_l)
    emb = jnp.asarray(_embed_matrix(H, W, pad_h), f32)            # (HW, pad_h)
    up = jnp.asarray(_upsample_crop_matrix(H, W, pad_l), f32)     # (pad_l, HW)
    crh = jnp.asarray(_crop_matrix(H, W, Wp, pad_h), f32)         # (pad_h, HW)
    crl = jnp.asarray(_crop_matrix(Hl, Wl, Wpl, pad_l), f32)      # (pad_l, HWl)

    kernel = functools.partial(
        _octave_fused_kernel, B=B, C=C, ch_in=ch_in, ch_out=ch_out,
        cl_out=cl_out, ch_out_p=ch_out_p, cl_out_p=cl_out_p,
        Wp=Wp, Wpl=Wpl, pad_h=pad_h, pad_l=pad_l)
    const2 = lambda n: (0, 0)

    oh, ol = pl.pallas_call(
        kernel,
        out_shape=(jax.ShapeDtypeStruct((N, ch_out, HW), f32),
                   jax.ShapeDtypeStruct((N, cl_out, HWl), f32)),
        grid_spec=pltpu.PrefetchScalarGridSpec(
            num_scalar_prefetch=0,
            grid=(N // B,),
            in_specs=[
                pl.BlockSpec((B * C, HW), lambda n: (n, 0)),
                pl.BlockSpec(w_h2h.shape, const2),
                pl.BlockSpec(w_low.shape, const2),
                pl.BlockSpec(pool.shape, const2),
                pl.BlockSpec(emb.shape, const2),
                pl.BlockSpec(up.shape, const2),
                pl.BlockSpec(crh.shape, const2),
                pl.BlockSpec(crl.shape, const2),
                pl.BlockSpec(b_h.shape, const2),
                pl.BlockSpec(b_l.shape, const2),
            ],
            out_specs=[
                pl.BlockSpec((B, ch_out, HW), lambda n: (n, 0, 0)),
                pl.BlockSpec((B, cl_out, HWl), lambda n: (n, 0, 0)),
            ],
        ),
        compiler_params=pltpu.CompilerParams(
            dimension_semantics=("parallel",)),
    )(x2d, w_h2h, w_low, pool, emb, up, crh, crl, b_h, b_l)

    # Compact lane-dense outputs -> NCHW: pure reshape, no slice, no transpose.
    return oh.reshape(N, ch_out, H, W), ol.reshape(N, cl_out, Hl, Wl)


# ----------------------------------------------------------------------------
# Pure-JAX (XLA) reference for correctness checking.
# ----------------------------------------------------------------------------
def avg_pool_2x2(x):  # NHWC
    N, H, W, C = x.shape
    return x.reshape(N, H // 2, 2, W // 2, 2, C).mean(axis=(2, 4))


def upsample_bilinear_x2_align_corners(x):  # NHWC
    N, H, W, C = x.shape
    Ho, Wo = 2 * H, 2 * W

    def coords(n_in, n_out):
        pos = jnp.arange(n_out, dtype=jnp.float32) * (n_in - 1) / (n_out - 1)
        lo = jnp.clip(jnp.floor(pos).astype(jnp.int32), 0, n_in - 2)
        return lo, lo + 1, pos - lo.astype(jnp.float32)

    ylo, yhi, fy = coords(H, Ho)
    xlo, xhi, fx = coords(W, Wo)
    rows = (x[:, ylo, :, :] * (1.0 - fy)[None, :, None, None]
            + x[:, yhi, :, :] * fy[None, :, None, None])
    return (rows[:, :, xlo, :] * (1.0 - fx)[None, None, :, None]
            + rows[:, :, xhi, :] * fx[None, None, :, None])


def _conv_ref(x_nhwc, w, b):
    y = lax.conv_general_dilated(
        x_nhwc, w, window_strides=(1, 1), padding=((1, 1), (1, 1)),
        dimension_numbers=("NHWC", "HWIO", "NHWC"),
        precision=lax.Precision.HIGHEST)
    return y + b[None, None, None, :]


def octave_conv2_reference(x_nchw, params):
    x = jnp.transpose(x_nchw, (0, 2, 3, 1))
    X_h, X_l = x[..., :64], x[..., 64:]
    X_l = avg_pool_2x2(X_l)
    X_h2l_in = avg_pool_2x2(X_h)
    X_h2h = _conv_ref(X_h, params["h2h_w"], params["h2h_b"])
    X_l2h = _conv_ref(X_l, params["l2h_w"], params["l2h_b"])
    X_l2l = _conv_ref(X_l, params["l2l_w"], params["l2l_b"])
    X_h2l = _conv_ref(X_h2l_in, params["h2l_w"], params["h2l_b"])
    X_l2h_up = upsample_bilinear_x2_align_corners(X_l2h)
    return (jnp.transpose(X_l2h_up + X_h2h, (0, 3, 1, 2)),
            jnp.transpose(X_h2l + X_l2l, (0, 3, 1, 2)))


def init_conv_params(key, cin, cout, k=3):
    kw, kb = jax.random.split(key)
    bound = 1.0 / math.sqrt(cin * k * k)
    w = jax.random.uniform(kw, (k, k, cin, cout), jnp.float32, -bound, bound)  # HWIO
    b = jax.random.uniform(kb, (cout,), jnp.float32, -bound, bound)
    return w, b


if __name__ == "__main__":
    # The forward hard-codes the high/low split at channel 64, which implies
    # in_channels = 256 with alpha = 0.75 (256 - int(0.75*256) == 64).
    in_channels, out_channels, alpha = 256, 16, 0.75
    low_in = int(alpha * in_channels)            # 192
    high_in = in_channels - low_in               # 64
    low_out = int(alpha * out_channels)          # 12
    high_out = out_channels - low_out            # 4
    N, H, W = 2, 16, 16

    key = jax.random.PRNGKey(0)
    kx, k1, k2, k3, k4 = jax.random.split(key, 5)
    params = {}
    params["l2l_w"], params["l2l_b"] = init_conv_params(k1, low_in, low_out)
    params["l2h_w"], params["l2h_b"] = init_conv_params(k2, low_in, high_out)
    params["h2l_w"], params["h2l_b"] = init_conv_params(k3, high_in, low_out)
    params["h2h_w"], params["h2h_b"] = init_conv_params(k4, high_in, high_out)

    x = jax.random.normal(kx, (N, in_channels, H, W), jnp.float32)   # NCHW

    X_h, X_l = jax.block_until_ready(octave_conv2_forward(x, params))

    assert X_h.shape == (N, high_out, H, W), X_h.shape
    assert X_l.shape == (N, low_out, H // 2, W // 2), X_l.shape

    Xh_ref, Xl_ref = octave_conv2_reference(x, params)
    err_h = float(jnp.max(jnp.abs(X_h - Xh_ref)))
    err_l = float(jnp.max(jnp.abs(X_l - Xl_ref)))
    # bf16 MXU conv/pool operands (f32 accumulate, f32 structural matrices)
    # vs f32 HIGHEST-precision reference.
    assert err_h < 2e-2 and err_l < 2e-2, (err_h, err_l)

    print("KERNEL_OK")
</pallas_src>

<mosaic_0001>
module attributes {stable_mosaic.version = 11 : i64} {
  func.func @_octave_fused_kernel(%arg0: i32, %arg1: memref<256x256xbf16, #tpu.memory_space<vmem>>, %arg2: memref<72x64xbf16, #tpu.memory_space<vmem>>, %arg3: memref<360x256xbf16, #tpu.memory_space<vmem>>, %arg4: memref<256x128xbf16, #tpu.memory_space<vmem>>, %arg5: memref<256x384xf32, #tpu.memory_space<vmem>>, %arg6: memref<128x256xf32, #tpu.memory_space<vmem>>, %arg7: memref<384x256xf32, #tpu.memory_space<vmem>>, %arg8: memref<128x64xf32, #tpu.memory_space<vmem>>, %arg9: memref<4x1xf32, #tpu.memory_space<vmem>>, %arg10: memref<12x1xf32, #tpu.memory_space<vmem>>, %arg11: memref<1x4x256xf32, #tpu.memory_space<vmem>>, %arg12: memref<1x12x64xf32, #tpu.memory_space<vmem>>) attributes {dimension_semantics = [#tpu.dimension_semantics<parallel>], iteration_bounds = array<i64: 2>, scalar_prefetch = 0 : i64, scratch_operands = 0 : i64, tpu.core_type = #tpu.core_type<tc>, window_params = [{transform_indices = @transform_0, window_bounds = array<i64: 256, 256>}, {pipeline_mode = #tpu.pipeline_mode<synchronous>, transform_indices = @transform_1, window_bounds = array<i64: 72, 64>}, {pipeline_mode = #tpu.pipeline_mode<synchronous>, transform_indices = @transform_2, window_bounds = array<i64: 360, 256>}, {pipeline_mode = #tpu.pipeline_mode<synchronous>, transform_indices = @transform_3, window_bounds = array<i64: 256, 128>}, {pipeline_mode = #tpu.pipeline_mode<synchronous>, transform_indices = @transform_4, window_bounds = array<i64: 256, 384>}, {pipeline_mode = #tpu.pipeline_mode<synchronous>, transform_indices = @transform_5, window_bounds = array<i64: 128, 256>}, {pipeline_mode = #tpu.pipeline_mode<synchronous>, transform_indices = @transform_6, window_bounds = array<i64: 384, 256>}, {pipeline_mode = #tpu.pipeline_mode<synchronous>, transform_indices = @transform_7, window_bounds = array<i64: 128, 64>}, {pipeline_mode = #tpu.pipeline_mode<synchronous>, transform_indices = @transform_8, window_bounds = array<i64: 4, 1>}, {pipeline_mode = #tpu.pipeline_mode<synchronous>, transform_indices = @transform_9, window_bounds = array<i64: 12, 1>}, {transform_indices = @transform_10, window_bounds = array<i64: 1, 4, 256>}, {transform_indices = @transform_11, window_bounds = array<i64: 1, 12, 64>}]} {
    %c0 = arith.constant 0 : index
    %c0_0 = arith.constant 0 : index
    %0 = vector.load %arg1[%c0, %c0_0] : memref<256x256xbf16, #tpu.memory_space<vmem>>, vector<256x256xbf16>
    %c0_1 = arith.constant 0 : index
    %c0_2 = arith.constant 0 : index
    %1 = vector.load %arg4[%c0_1, %c0_2] : memref<256x128xbf16, #tpu.memory_space<vmem>>, vector<256x128xbf16>
    %cst = arith.constant dense<0.000000e+00> : vector<256x128xf32>
    %2 = tpu.matmul %0, %1, %cst {dimension_numbers = #tpu.dot_dimension_numbers<[1], [0], [0], [1], [0, 0, 1, 1], [], []>} : vector<256x256xbf16>, vector<256x128xbf16>, vector<256x128xf32> -> vector<256x128xf32>
    %3 = arith.truncf %2 : vector<256x128xf32> to vector<256x128xbf16>
    %4 = vector.extract_strided_slice %0 {offsets = [0, 0], sizes = [64, 256], strides = [1, 1]} : vector<256x256xbf16> to vector<64x256xbf16>
    %c0_3 = arith.constant 0 : index
    %c0_4 = arith.constant 0 : index
    %5 = vector.load %arg2[%c0_3, %c0_4] : memref<72x64xbf16, #tpu.memory_space<vmem>>, vector<72x64xbf16>
    %cst_5 = arith.constant dense<0.000000e+00> : vector<72x256xf32>
    %6 = tpu.matmul %5, %4, %cst_5 {dimension_numbers = #tpu.dot_dimension_numbers<[1], [0], [0], [1], [0, 0, 1, 1], [], []>} : vector<72x64xbf16>, vector<64x256xbf16>, vector<72x256xf32> -> vector<72x256xf32>
    %c0_6 = arith.constant 0 : index
    %c0_7 = arith.constant 0 : index
    %7 = vector.load %arg5[%c0_6, %c0_7] : memref<256x384xf32, #tpu.memory_space<vmem>>, vector<256x384xf32>
    %cst_8 = arith.constant dense<0.000000e+00> : vector<72x384xf32>
    %8 = tpu.matmul %6, %7, %cst_8 {dimension_numbers = #tpu.dot_dimension_numbers<[1], [0], [0], [1], [0, 0, 1, 1], [], []>} : vector<72x256xf32>, vector<256x384xf32>, vector<72x384xf32> -> vector<72x384xf32>
    %c0_9 = arith.constant 0 : index
    %c0_10 = arith.constant 0 : index
    %9 = vector.load %arg3[%c0_9, %c0_10] : memref<360x256xbf16, #tpu.memory_space<vmem>>, vector<360x256xbf16>
    %cst_11 = arith.constant dense<0.000000e+00> : vector<360x128xf32>
    %10 = tpu.matmul %9, %3, %cst_11 {dimension_numbers = #tpu.dot_dimension_numbers<[1], [0], [0], [1], [0, 0, 1, 1], [], []>} : vector<360x256xbf16>, vector<256x128xbf16>, vector<360x128xf32> -> vector<360x128xf32>
    %11 = vector.extract_strided_slice %8 {offsets = [0, 0], sizes = [8, 384], strides = [1, 1]} : vector<72x384xf32> to vector<8x384xf32>
    %12 = vector.extract_strided_slice %8 {offsets = [8, 0], sizes = [8, 384], strides = [1, 1]} : vector<72x384xf32> to vector<8x384xf32>
    %c383_i32 = arith.constant 383 : i32
    %13 = tpu.dynamic_rotate %12 by %c383_i32 dim 1 : vector<8x384xf32>, i32 -> vector<8x384xf32>
    %14 = arith.addf %11, %13 : vector<8x384xf32>
    %15 = vector.extract_strided_slice %8 {offsets = [16, 0], sizes = [8, 384], strides = [1, 1]} : vector<72x384xf32> to vector<8x384xf32>
    %c382_i32 = arith.constant 382 : i32
    %16 = tpu.dynamic_rotate %15 by %c382_i32 dim 1 : vector<8x384xf32>, i32 -> vector<8x384xf32>
    %17 = arith.addf %14, %16 : vector<8x384xf32>
    %18 = vector.extract_strided_slice %8 {offsets = [24, 0], sizes = [8, 384], strides = [1, 1]} : vector<72x384xf32> to vector<8x384xf32>
    %c366_i32 = arith.constant 366 : i32
    %19 = tpu.dynamic_rotate %18 by %c366_i32 dim 1 : vector<8x384xf32>, i32 -> vector<8x384xf32>
    %20 = arith.addf %17, %19 : vector<8x384xf32>
    %21 = vector.extract_strided_slice %8 {offsets = [32, 0], sizes = [8, 384], strides = [1, 1]} : vector<72x384xf32> to vector<8x384xf32>
    %c365_i32 = arith.constant 365 : i32
    %22 = tpu.dynamic_rotate %21 by %c365_i32 dim 1 : vector<8x384xf32>, i32 -> vector<8x384xf32>
    %23 = arith.addf %20, %22 : vector<8x384xf32>
    %24 = vector.extract_strided_slice %8 {offsets = [40, 0], sizes = [8, 384], strides = [1, 1]} : vector<72x384xf32> to vector<8x384xf32>
    %c364_i32 = arith.constant 364 : i32
    %25 = tpu.dynamic_rotate %24 by %c364_i32 dim 1 : vector<8x384xf32>, i32 -> vector<8x384xf32>
    %26 = arith.addf %23, %25 : vector<8x384xf32>
    %27 = vector.extract_strided_slice %8 {offsets = [48, 0], sizes = [8, 384], strides = [1, 1]} : vector<72x384xf32> to vector<8x384xf32>
    %c348_i32 = arith.constant 348 : i32
    %28 = tpu.dynamic_rotate %27 by %c348_i32 dim 1 : vector<8x384xf32>, i32 -> vector<8x384xf32>
    %29 = arith.addf %26, %28 : vector<8x384xf32>
    %30 = vector.extract_strided_slice %8 {offsets = [56, 0], sizes = [8, 384], strides = [1, 1]} : vector<72x384xf32> to vector<8x384xf32>
    %c347_i32 = arith.constant 347 : i32
    %31 = tpu.dynamic_rotate %30 by %c347_i32 dim 1 : vector<8x384xf32>, i32 -> vector<8x384xf32>
    %32 = arith.addf %29, %31 : vector<8x384xf32>
    %33 = vector.extract_strided_slice %8 {offsets = [64, 0], sizes = [8, 384], strides = [1, 1]} : vector<72x384xf32> to vector<8x384xf32>
    %c346_i32 = arith.constant 346 : i32
    %34 = tpu.dynamic_rotate %33 by %c346_i32 dim 1 : vector<8x384xf32>, i32 -> vector<8x384xf32>
    %35 = arith.addf %32, %34 : vector<8x384xf32>
    %36 = vector.extract_strided_slice %10 {offsets = [0, 0], sizes = [40, 128], strides = [1, 1]} : vector<360x128xf32> to vector<40x128xf32>
    %37 = vector.extract_strided_slice %10 {offsets = [40, 0], sizes = [40, 128], strides = [1, 1]} : vector<360x128xf32> to vector<40x128xf32>
    %c127_i32 = arith.constant 127 : i32
    %38 = tpu.dynamic_rotate %37 by %c127_i32 dim 1 : vector<40x128xf32>, i32 -> vector<40x128xf32>
    %39 = arith.addf %36, %38 : vector<40x128xf32>
    %40 = vector.extract_strided_slice %10 {offsets = [80, 0], sizes = [40, 128], strides = [1, 1]} : vector<360x128xf32> to vector<40x128xf32>
    %c126_i32 = arith.constant 126 : i32
    %41 = tpu.dynamic_rotate %40 by %c126_i32 dim 1 : vector<40x128xf32>, i32 -> vector<40x128xf32>
    %42 = arith.addf %39, %41 : vector<40x128xf32>
    %43 = vector.extract_strided_slice %10 {offsets = [120, 0], sizes = [40, 128], strides = [1, 1]} : vector<360x128xf32> to vector<40x128xf32>
    %c118_i32 = arith.constant 118 : i32
    %44 = tpu.dynamic_rotate %43 by %c118_i32 dim 1 : vector<40x128xf32>, i32 -> vector<40x128xf32>
    %45 = arith.addf %42, %44 : vector<40x128xf32>
    %46 = vector.extract_strided_slice %10 {offsets = [160, 0], sizes = [40, 128], strides = [1, 1]} : vector<360x128xf32> to vector<40x128xf32>
    %c117_i32 = arith.constant 117 : i32
    %47 = tpu.dynamic_rotate %46 by %c117_i32 dim 1 : vector<40x128xf32>, i32 -> vector<40x128xf32>
    %48 = arith.addf %45, %47 : vector<40x128xf32>
    %49 = vector.extract_strided_slice %10 {offsets = [200, 0], sizes = [40, 128], strides = [1, 1]} : vector<360x128xf32> to vector<40x128xf32>
    %c116_i32 = arith.constant 116 : i32
    %50 = tpu.dynamic_rotate %49 by %c116_i32 dim 1 : vector<40x128xf32>, i32 -> vector<40x128xf32>
    %51 = arith.addf %48, %50 : vector<40x128xf32>
    %52 = vector.extract_strided_slice %10 {offsets = [240, 0], sizes = [40, 128], strides = [1, 1]} : vector<360x128xf32> to vector<40x128xf32>
    %c108_i32 = arith.constant 108 : i32
    %53 = tpu.dynamic_rotate %52 by %c108_i32 dim 1 : vector<40x128xf32>, i32 -> vector<40x128xf32>
    %54 = arith.addf %51, %53 : vector<40x128xf32>
    %55 = vector.extract_strided_slice %10 {offsets = [280, 0], sizes = [40, 128], strides = [1, 1]} : vector<360x128xf32> to vector<40x128xf32>
    %c107_i32 = arith.constant 107 : i32
    %56 = tpu.dynamic_rotate %55 by %c107_i32 dim 1 : vector<40x128xf32>, i32 -> vector<40x128xf32>
    %57 = arith.addf %54, %56 : vector<40x128xf32>
    %58 = vector.extract_strided_slice %10 {offsets = [320, 0], sizes = [40, 128], strides = [1, 1]} : vector<360x128xf32> to vector<40x128xf32>
    %c106_i32 = arith.constant 106 : i32
    %59 = tpu.dynamic_rotate %58 by %c106_i32 dim 1 : vector<40x128xf32>, i32 -> vector<40x128xf32>
    %60 = arith.addf %57, %59 : vector<40x128xf32>
    %61 = vector.extract_strided_slice %60 {offsets = [0, 0], sizes = [8, 128], strides = [1, 1]} : vector<40x128xf32> to vector<8x128xf32>
    %c0_12 = arith.constant 0 : index
    %c0_13 = arith.constant 0 : index
    %62 = vector.load %arg6[%c0_12, %c0_13] : memref<128x256xf32, #tpu.memory_space<vmem>>, vector<128x256xf32>
    %cst_14 = arith.constant dense<0.000000e+00> : vector<8x256xf32>
    %63 = tpu.matmul %61, %62, %cst_14 {dimension_numbers = #tpu.dot_dimension_numbers<[1], [0], [0], [1], [0, 0, 1, 1], [], []>} : vector<8x128xf32>, vector<128x256xf32>, vector<8x256xf32> -> vector<8x256xf32>
    %c0_15 = arith.constant 0 : index
    %c0_16 = arith.constant 0 : index
    %64 = vector.load %arg7[%c0_15, %c0_16] : memref<384x256xf32, #tpu.memory_space<vmem>>, vector<384x256xf32>
    %cst_17 = arith.constant dense<0.000000e+00> : vector<8x256xf32>
    %65 = tpu.matmul %35, %64, %cst_17 {dimension_numbers = #tpu.dot_dimension_numbers<[1], [0], [0], [1], [0, 0, 1, 1], [], []>} : vector<8x384xf32>, vector<384x256xf32>, vector<8x256xf32> -> vector<8x256xf32>
    %66 = arith.addf %65, %63 : vector<8x256xf32>
    %67 = vector.extract_strided_slice %66 {offsets = [0, 0], sizes = [4, 256], strides = [1, 1]} : vector<8x256xf32> to vector<4x256xf32>
    %c0_18 = arith.constant 0 : index
    %c0_19 = arith.constant 0 : index
    %68 = vector.load %arg9[%c0_18, %c0_19] : memref<4x1xf32, #tpu.memory_space<vmem>>, vector<4x1xf32>
    %69 = vector.broadcast %68 : vector<4x1xf32> to vector<4x256xf32>
    %70 = arith.addf %67, %69 : vector<4x256xf32>
    %c0_20 = arith.constant 0 : index
    %c0_21 = arith.constant 0 : index
    %c0_22 = arith.constant 0 : index
    %71 = vector.load %arg11[%c0_20, %c0_21, %c0_22] : memref<1x4x256xf32, #tpu.memory_space<vmem>>, vector<1x4x256xf32>
    %72 = vector.shape_cast %71 : vector<1x4x256xf32> to vector<4x256xf32>
    %73 = vector.shape_cast %70 : vector<4x256xf32> to vector<1x4x256xf32>
    tpu.vector_store %arg11[%c0_20, %c0_21, %c0_22], %73 {strides = array<i32>} : memref<1x4x256xf32, #tpu.memory_space<vmem>>, vector<1x4x256xf32>,
    %74 = vector.extract_strided_slice %60 {offsets = [8, 0], sizes = [16, 128], strides = [1, 1]} : vector<40x128xf32> to vector<16x128xf32>
    %75 = vector.extract_strided_slice %60 {offsets = [24, 0], sizes = [16, 128], strides = [1, 1]} : vector<40x128xf32> to vector<16x128xf32>
    %76 = arith.addf %74, %75 : vector<16x128xf32>
    %c0_23 = arith.constant 0 : index
    %c0_24 = arith.constant 0 : index
    %77 = vector.load %arg8[%c0_23, %c0_24] : memref<128x64xf32, #tpu.memory_space<vmem>>, vector<128x64xf32>
    %cst_25 = arith.constant dense<0.000000e+00> : vector<16x64xf32>
    %78 = tpu.matmul %76, %77, %cst_25 {dimension_numbers = #tpu.dot_dimension_numbers<[1], [0], [0], [1], [0, 0, 1, 1], [], []>} : vector<16x128xf32>, vector<128x64xf32>, vector<16x64xf32> -> vector<16x64xf32>
    %79 = vector.extract_strided_slice %78 {offsets = [0, 0], sizes = [12, 64], strides = [1, 1]} : vector<16x64xf32> to vector<12x64xf32>
    %c0_26 = arith.constant 0 : index
    %c0_27 = arith.constant 0 : index
    %80 = vector.load %arg10[%c0_26, %c0_27] : memref<12x1xf32, #tpu.memory_space<vmem>>, vector<12x1xf32>
    %81 = vector.broadcast %80 : vector<12x1xf32> to vector<12x64xf32>
    %82 = arith.addf %79, %81 : vector<12x64xf32>
    %c0_28 = arith.constant 0 : index
    %c0_29 = arith.constant 0 : index
    %c0_30 = arith.constant 0 : index
    %83 = vector.load %arg12[%c0_28, %c0_29, %c0_30] : memref<1x12x64xf32, #tpu.memory_space<vmem>>, vector<1x12x64xf32>
    %84 = vector.shape_cast %83 : vector<1x12x64xf32> to vector<12x64xf32>
    %85 = vector.shape_cast %82 : vector<12x64xf32> to vector<1x12x64xf32>
    tpu.vector_store %arg12[%c0_28, %c0_29, %c0_30], %85 {strides = array<i32>} : memref<1x12x64xf32, #tpu.memory_space<vmem>>, vector<1x12x64xf32>,
    return
  }
  func.func @transform_0(%arg0: i32) -> (i32, i32) {
    %c0_i32 = arith.constant 0 : i32
    %c0_i32_0 = arith.constant 0 : i32
    return %arg0, %c0_i32 : i32, i32
  }
  func.func @transform_1(%arg0: i32) -> (i32, i32) {
    %c0_i32 = arith.constant 0 : i32
    %c0_i32_0 = arith.constant 0 : i32
    %c0_i32_1 = arith.constant 0 : i32
    return %c0_i32, %c0_i32_0 : i32, i32
  }
  func.func @transform_2(%arg0: i32) -> (i32, i32) {
    %c0_i32 = arith.constant 0 : i32
    %c0_i32_0 = arith.constant 0 : i32
    %c0_i32_1 = arith.constant 0 : i32
    return %c0_i32, %c0_i32_0 : i32, i32
  }
  func.func @transform_3(%arg0: i32) -> (i32, i32) {
    %c0_i32 = arith.constant 0 : i32
    %c0_i32_0 = arith.constant 0 : i32
    %c0_i32_1 = arith.constant 0 : i32
    return %c0_i32, %c0_i32_0 : i32, i32
  }
  func.func @transform_4(%arg0: i32) -> (i32, i32) {
    %c0_i32 = arith.constant 0 : i32
    %c0_i32_0 = arith.constant 0 : i32
    %c0_i32_1 = arith.constant 0 : i32
    return %c0_i32, %c0_i32_0 : i32, i32
  }
  func.func @transform_5(%arg0: i32) -> (i32, i32) {
    %c0_i32 = arith.constant 0 : i32
    %c0_i32_0 = arith.constant 0 : i32
    %c0_i32_1 = arith.constant 0 : i32
    return %c0_i32, %c0_i32_0 : i32, i32
  }
  func.func @transform_6(%arg0: i32) -> (i32, i32) {
    %c0_i32 = arith.constant 0 : i32
    %c0_i32_0 = arith.constant 0 : i32
    %c0_i32_1 = arith.constant 0 : i32
    return %c0_i32, %c0_i32_0 : i32, i32
  }
  func.func @transform_7(%arg0: i32) -> (i32, i32) {
    %c0_i32 = arith.constant 0 : i32
    %c0_i32_0 = arith.constant 0 : i32
    %c0_i32_1 = arith.constant 0 : i32
    return %c0_i32, %c0_i32_0 : i32, i32
  }
  func.func @transform_8(%arg0: i32) -> (i32, i32) {
    %c0_i32 = arith.constant 0 : i32
    %c0_i32_0 = arith.constant 0 : i32
    %c0_i32_1 = arith.constant 0 : i32
    return %c0_i32, %c0_i32_0 : i32, i32
  }
  func.func @transform_9(%arg0: i32) -> (i32, i32) {
    %c0_i32 = arith.constant 0 : i32
    %c0_i32_0 = arith.constant 0 : i32
    %c0_i32_1 = arith.constant 0 : i32
    return %c0_i32, %c0_i32_0 : i32, i32
  }
  func.func @transform_10(%arg0: i32) -> (i32, i32, i32) {
    %c0_i32 = arith.constant 0 : i32
    %c0_i32_0 = arith.constant 0 : i32
    %c0_i32_1 = arith.constant 0 : i32
    return %arg0, %c0_i32, %c0_i32_0 : i32, i32, i32
  }
  func.func @transform_11(%arg0: i32) -> (i32, i32, i32) {
    %c0_i32 = arith.constant 0 : i32
    %c0_i32_0 = arith.constant 0 : i32
    %c0_i32_1 = arith.constant 0 : i32
    return %arg0, %c0_i32, %c0_i32_0 : i32, i32, i32
  }
}

</mosaic_0001>

<llo_original>
// kernel: octave_conv2_forward.1
$region0: #{octave_conv2_forward.1}
  #allocation0 [shape = 'u32[]', space=smem, size = 0x4, offset = 0x4, fixed_abs, tag = 'smem constant byte address 0x4 - core index']
  #allocation1 [shape = 'u32[144,128]{1,0:T(1,128)}', space=vmem, size = 0x12000, scoped, tag = 'internal scratch']
  %s0 = inlined_call_operand.vmem [shape: bf16[512,256], index: 0, kind: input, shape index: {}]
  %s1 = inlined_call_operand.vmem [shape: bf16[72,64], index: 1, kind: input, shape index: {}]
  %s2 = inlined_call_operand.vmem [shape: bf16[360,256], index: 2, kind: input, shape index: {}]
  %s3 = inlined_call_operand.vmem [shape: bf16[256,128], index: 3, kind: input, shape index: {}]
  %s4 = inlined_call_operand.vmem [shape: f32[256,384], index: 4, kind: input, shape index: {}]
  %s5 = inlined_call_operand.vmem [shape: f32[128,256], index: 5, kind: input, shape index: {}]
  %s6 = inlined_call_operand.vmem [shape: f32[384,256], index: 6, kind: input, shape index: {}]
  %s7 = inlined_call_operand.vmem [shape: f32[128,64], index: 7, kind: input, shape index: {}]
  %s8 = inlined_call_operand.vmem [shape: f32[4,1], index: 8, kind: input, shape index: {}]
  %s9 = inlined_call_operand.vmem [shape: f32[12,1], index: 9, kind: input, shape index: {}]
  %s10 = inlined_call_operand.vmem [shape: f32[2,4,256], index: 10, kind: output, shape index: {0}]
  %s11 = inlined_call_operand.vmem [shape: f32[2,12,64], index: 11, kind: output, shape index: {1}]
  %12 = xla_tuple %s10, %s11
  %s13 = sld [smem:[#allocation0]]
  $region81: #{octave_conv2_forward.1} parent=0
    _
  %s15 = ssub.s32 1, %s13
  %s16 = scalar_select 0, %s15, %s13
  loop: start=0, step=1, limit=4
  $region2: #{octave_conv2_forward.1} parent=0 // loop_pre_header
    _
  $region3: #{octave_conv2_forward.1} parent=0 // loop_header
    %s18 = sphi 0, %s22
    %p19 = scmp.ge.s32.totalorder %s18, 4
    %s28 = sphi 0, %s30
    %s31 = sphi 0, %s28
    %s32 = sphi 0, %s31
    %s48 = sphi 0, %s32
    %s52 = sphi 0, %s52
    %s54 = sphi 0, %s52
    %s55 = sphi 0, %s54
    %s69 = sphi 0, %s55
    %s73 = sphi 0, %s73
    %s75 = sphi 0, %s73
    %s76 = sphi 0, %s75
    %s90 = sphi 0, %s76
    %s94 = sphi 0, %s94
    %s96 = sphi 0, %s94
    %s97 = sphi 0, %s96
    %s111 = sphi 0, %s97
    %s115 = sphi 0, %s115
    %s117 = sphi 0, %s115
    %s118 = sphi 0, %s117
    %s132 = sphi 0, %s118
    %s136 = sphi 0, %s136
    %s138 = sphi 0, %s136
    %s139 = sphi 0, %s138
    %s153 = sphi 0, %s139
    %s157 = sphi 0, %s157
    %s159 = sphi 0, %s157
    %s160 = sphi 0, %s159
    %s174 = sphi 0, %s160
    %s178 = sphi 0, %s178
    %s180 = sphi 0, %s178
    %s181 = sphi 0, %s180
    %s195 = sphi 0, %s181
    %s199 = sphi 0, %s199
    %s201 = sphi 0, %s199
    %s202 = sphi 0, %s201
    %s216 = sphi 0, %s202
    %s220 = sphi 0, %s220
    %s222 = sphi 0, %s220
    %s223 = sphi 0, %s222
    %s237 = sphi 0, %s223
    %s243 = sphi 0, %s245
    %s246 = sphi 0, %s243
    %s247 = sphi 0, %s246
    %s263 = sphi 0, %s247
    %s269 = sphi 0, %s271
    %s272 = sphi 0, %s269
    %s273 = sphi 0, %s272
    %s289 = sphi 0, %s273
  $region4: #{octave_conv2_forward.1} parent=0 // loop_header_branch
    %21 = sbr.rel (%p19) target = $region8
  $region5: #{octave_conv2_forward.1} parent=0 // loop_body
    %s23 = ssub.s32 %s18, 1
    %s24 = ssub.s32 %s18, 2
    %s25 = sadd.s32 %s18, 1
    %s26 = ssub.s32 %s18, %s25
    %p27 = scmp.eq.s32.totalorder %s26, 0
    %s29 = sadd.s32 %s28, 1
    %s30 = scalar_select %p27, %s28, %s29
    %p33 = pneg %p27
    %p34 = scmp.eq.s32.totalorder %s18, 1
    %p35 = por %p33, %p34
    %p36 = scmp.ne.s32.totalorder %s28, %s31
    %p37 = scmp.eq.s32.totalorder %s18, 0
    %p38 = por %p36, %p37
    %p39 = scmp.ne.s32.totalorder %s28, %s31
    %p40 = scmp.eq.s32.totalorder %s23, 1
    %p41 = por %p39, %p40
    %p42 = scmp.ne.s32.totalorder %s31, %s32
    %p43 = scmp.eq.s32.totalorder %s23, 0
    %p44 = por %p42, %p43
    %p45 = scmp.ne.s32.totalorder %s31, %s32
    %p46 = scmp.eq.s32.totalorder %s24, 1
    %p47 = por %p45, %p46
    %p49 = scmp.ne.s32.totalorder %s32, %s48
    %p50 = scmp.eq.s32.totalorder %s24, 0
    %p51 = por %p49, %p50
    %s53 = sadd.s32 %s52, 1
    %p56 = scmp.eq.s32.totalorder %s18, 1
    %p57 = scmp.ne.s32.totalorder %s52, %s54
    %p58 = scmp.eq.s32.totalorder %s18, 0
    %p59 = por %p57, %p58
    %p60 = scmp.ne.s32.totalorder %s52, %s54
    %p61 = scmp.eq.s32.totalorder %s23, 1
    %p62 = por %p60, %p61
    %p63 = scmp.ne.s32.totalorder %s54, %s55
    %p64 = scmp.eq.s32.totalorder %s23, 0
    %p65 = por %p63, %p64
    %p66 = scmp.ne.s32.totalorder %s54, %s55
    %p67 = scmp.eq.s32.totalorder %s24, 1
    %p68 = por %p66, %p67
    %p70 = scmp.ne.s32.totalorder %s55, %s69
    %p71 = scmp.eq.s32.totalorder %s24, 0
    %p72 = por %p70, %p71
    %s74 = sadd.s32 %s73, 1
    %p77 = scmp.eq.s32.totalorder %s18, 1
    %p78 = scmp.ne.s32.totalorder %s73, %s75
    %p79 = scmp.eq.s32.totalorder %s18, 0
    %p80 = por %p78, %p79
    %p81 = scmp.ne.s32.totalorder %s73, %s75
    %p82 = scmp.eq.s32.totalorder %s23, 1
    %p83 = por %p81, %p82
    %p84 = scmp.ne.s32.totalorder %s75, %s76
    %p85 = scmp.eq.s32.totalorder %s23, 0
    %p86 = por %p84, %p85
    %p87 = scmp.ne.s32.totalorder %s75, %s76
    %p88 = scmp.eq.s32.totalorder %s24, 1
    %p89 = por %p87, %p88
    %p91 = scmp.ne.s32.totalorder %s76, %s90
    %p92 = scmp.eq.s32.totalorder %s24, 0
    %p93 = por %p91, %p92
    %s95 = sadd.s32 %s94, 1
    %p98 = scmp.eq.s32.totalorder %s18, 1
    %p99 = scmp.ne.s32.totalorder %s94, %s96
    %p100 = scmp.eq.s32.totalorder %s18, 0
    %p101 = por %p99, %p100
    %p102 = scmp.ne.s32.totalorder %s94, %s96
    %p103 = scmp.eq.s32.totalorder %s23, 1
    %p104 = por %p102, %p103
    %p105 = scmp.ne.s32.totalorder %s96, %s97
    %p106 = scmp.eq.s32.totalorder %s23, 0
    %p107 = por %p105, %p106
    %p108 = scmp.ne.s32.totalorder %s96, %s97
    %p109 = scmp.eq.s32.totalorder %s24, 1
    %p110 = por %p108, %p109
    %p112 = scmp.ne.s32.totalorder %s97, %s111
    %p113 = scmp.eq.s32.totalorder %s24, 0
    %p114 = por %p112, %p113
    %s116 = sadd.s32 %s115, 1
    %p119 = scmp.eq.s32.totalorder %s18, 1
    %p120 = scmp.ne.s32.totalorder %s115, %s117
    %p121 = scmp.eq.s32.totalorder %s18, 0
    %p122 = por %p120, %p121
    %p123 = scmp.ne.s32.totalorder %s115, %s117
    %p124 = scmp.eq.s32.totalorder %s23, 1
    %p125 = por %p123, %p124
    %p126 = scmp.ne.s32.totalorder %s117, %s118
    %p127 = scmp.eq.s32.totalorder %s23, 0
    %p128 = por %p126, %p127
    %p129 = scmp.ne.s32.totalorder %s117, %s118
    %p130 = scmp.eq.s32.totalorder %s24, 1
    %p131 = por %p129, %p130
    %p133 = scmp.ne.s32.totalorder %s118, %s132
    %p134 = scmp.eq.s32.totalorder %s24, 0
    %p135 = por %p133, %p134
    %s137 = sadd.s32 %s136, 1
    %p140 = scmp.eq.s32.totalorder %s18, 1
    %p141 = scmp.ne.s32.totalorder %s136, %s138
    %p142 = scmp.eq.s32.totalorder %s18, 0
    %p143 = por %p141, %p142
    %p144 = scmp.ne.s32.totalorder %s136, %s138
    %p145 = scmp.eq.s32.totalorder %s23, 1
    %p146 = por %p144, %p145
    %p147 = scmp.ne.s32.totalorder %s138, %s139
    %p148 = scmp.eq.s32.totalorder %s23, 0
    %p149 = por %p147, %p148
    %p150 = scmp.ne.s32.totalorder %s138, %s139
    %p151 = scmp.eq.s32.totalorder %s24, 1
    %p152 = por %p150, %p151
    %p154 = scmp.ne.s32.totalorder %s139, %s153
    %p155 = scmp.eq.s32.totalorder %s24, 0
    %p156 = por %p154, %p155
    %s158 = sadd.s32 %s157, 1
    %p161 = scmp.eq.s32.totalorder %s18, 1
    %p162 = scmp.ne.s32.totalorder %s157, %s159
    %p163 = scmp.eq.s32.totalorder %s18, 0
    %p164 = por %p162, %p163
    %p165 = scmp.ne.s32.totalorder %s157, %s159
    %p166 = scmp.eq.s32.totalorder %s23, 1
    %p167 = por %p165, %p166
    %p168 = scmp.ne.s32.totalorder %s159, %s160
    %p169 = scmp.eq.s32.totalorder %s23, 0
    %p170 = por %p168, %p169
    %p171 = scmp.ne.s32.totalorder %s159, %s160
    %p172 = scmp.eq.s32.totalorder %s24, 1
    %p173 = por %p171, %p172
    %p175 = scmp.ne.s32.totalorder %s160, %s174
    %p176 = scmp.eq.s32.totalorder %s24, 0
    %p177 = por %p175, %p176
    %s179 = sadd.s32 %s178, 1
    %p182 = scmp.eq.s32.totalorder %s18, 1
    %p183 = scmp.ne.s32.totalorder %s178, %s180
    %p184 = scmp.eq.s32.totalorder %s18, 0
    %p185 = por %p183, %p184
    %p186 = scmp.ne.s32.totalorder %s178, %s180
    %p187 = scmp.eq.s32.totalorder %s23, 1
    %p188 = por %p186, %p187
    %p189 = scmp.ne.s32.totalorder %s180, %s181
    %p190 = scmp.eq.s32.totalorder %s23, 0
    %p191 = por %p189, %p190
    %p192 = scmp.ne.s32.totalorder %s180, %s181
    %p193 = scmp.eq.s32.totalorder %s24, 1
    %p194 = por %p192, %p193
    %p196 = scmp.ne.s32.totalorder %s181, %s195
    %p197 = scmp.eq.s32.totalorder %s24, 0
    %p198 = por %p196, %p197
    %s200 = sadd.s32 %s199, 1
    %p203 = scmp.eq.s32.totalorder %s18, 1
    %p204 = scmp.ne.s32.totalorder %s199, %s201
    %p205 = scmp.eq.s32.totalorder %s18, 0
    %p206 = por %p204, %p205
    %p207 = scmp.ne.s32.totalorder %s199, %s201
    %p208 = scmp.eq.s32.totalorder %s23, 1
    %p209 = por %p207, %p208
    %p210 = scmp.ne.s32.totalorder %s201, %s202
    %p211 = scmp.eq.s32.totalorder %s23, 0
    %p212 = por %p210, %p211
    %p213 = scmp.ne.s32.totalorder %s201, %s202
    %p214 = scmp.eq.s32.totalorder %s24, 1
    %p215 = por %p213, %p214
    %p217 = scmp.ne.s32.totalorder %s202, %s216
    %p218 = scmp.eq.s32.totalorder %s24, 0
    %p219 = por %p217, %p218
    %s221 = sadd.s32 %s220, 1
    %p224 = scmp.eq.s32.totalorder %s18, 1
    %p225 = scmp.ne.s32.totalorder %s220, %s222
    %p226 = scmp.eq.s32.totalorder %s18, 0
    %p227 = por %p225, %p226
    %p228 = scmp.ne.s32.totalorder %s220, %s222
    %p229 = scmp.eq.s32.totalorder %s23, 1
    %p230 = por %p228, %p229
    %p231 = scmp.ne.s32.totalorder %s222, %s223
    %p232 = scmp.eq.s32.totalorder %s23, 0
    %p233 = por %p231, %p232
    %p234 = scmp.ne.s32.totalorder %s222, %s223
    %p235 = scmp.eq.s32.totalorder %s24, 1
    %p236 = por %p234, %p235
    %p238 = scmp.ne.s32.totalorder %s223, %s237
    %p239 = scmp.eq.s32.totalorder %s24, 0
    %p240 = por %p238, %p239
    %s241 = ssub.s32 %s18, %s25
    %p242 = scmp.eq.s32.totalorder %s241, 0
    %s244 = sadd.s32 %s243, 1
    %s245 = scalar_select %p242, %s243, %s244
    %p248 = pneg %p242
    %p249 = scmp.eq.s32.totalorder %s18, 1
    %p250 = por %p248, %p249
    %p251 = scmp.ne.s32.totalorder %s243, %s246
    %p252 = scmp.eq.s32.totalorder %s18, 0
    %p253 = por %p251, %p252
    %p254 = scmp.ne.s32.totalorder %s243, %s246
    %p255 = scmp.eq.s32.totalorder %s23, 1
    %p256 = por %p254, %p255
    %p257 = scmp.ne.s32.totalorder %s246, %s247
    %p258 = scmp.eq.s32.totalorder %s23, 0
    %p259 = por %p257, %p258
    %p260 = scmp.ne.s32.totalorder %s246, %s247
    %p261 = scmp.eq.s32.totalorder %s24, 1
    %p262 = por %p260, %p261
    %p264 = scmp.ne.s32.totalorder %s247, %s263
    %p265 = scmp.eq.s32.totalorder %s24, 0
    %p266 = por %p264, %p265
    %s267 = ssub.s32 %s18, %s25
    %p268 = scmp.eq.s32.totalorder %s267, 0
    %s270 = sadd.s32 %s269, 1
    %s271 = scalar_select %p268, %s269, %s270
    %p274 = pneg %p268
    %p275 = scmp.eq.s32.totalorder %s18, 1
    %p276 = por %p274, %p275
    %p277 = scmp.ne.s32.totalorder %s269, %s272
    %p278 = scmp.eq.s32.totalorder %s18, 0
    %p279 = por %p277, %p278
    %p280 = scmp.ne.s32.totalorder %s269, %s272
    %p281 = scmp.eq.s32.totalorder %s23, 1
    %p282 = por %p280, %p281
    %p283 = scmp.ne.s32.totalorder %s272, %s273
    %p284 = scmp.eq.s32.totalorder %s23, 0
    %p285 = por %p283, %p284
    %p286 = scmp.ne.s32.totalorder %s272, %s273
    %p287 = scmp.eq.s32.totalorder %s24, 1
    %p288 = por %p286, %p287
    %p290 = scmp.ne.s32.totalorder %s273, %s289
    %p291 = scmp.eq.s32.totalorder %s24, 0
    %p292 = por %p290, %p291
    %p293 = scmp.le.s32.totalorder 1, %s18
    %p294 = scmp.lt.s32.totalorder %s18, 3
    %p295 = pnand %p293, %p294
    %p296 = pneg %p295
    // Predicated region
    $region9: #{octave_conv2_forward.1} parent=5 // pred_check
      _
    $region10: #{octave_conv2_forward.1} parent=5 // pred_check_branch
      %298 = sbr.rel (%p295) target = $region12
    $region11: #{octave_conv2_forward.1} parent=5 // pred_region
      %s299 = ssub.s32 %s18, 1
      // Predicated region
      $region13: #{octave_conv2_forward.1} parent=11 // pred_check
        %p300 = pneg %p65
      $region14: #{octave_conv2_forward.1} parent=11 // pred_check_branch
        %302 = sbr.rel (%p300) target = $region16
      $region15: #{octave_conv2_forward.1} parent=11 // pred_region
        _
      $region16: #{octave_conv2_forward.1} parent=11 // pred_fallthru
        _
      // Predicated region
      $region17: #{octave_conv2_forward.1} parent=11 // pred_check
        %p303 = pneg %p86
      $region18: #{octave_conv2_forward.1} parent=11 // pred_check_branch
        %305 = sbr.rel (%p303) target = $region20
      $region19: #{octave_conv2_forward.1} parent=11 // pred_region
        _
      $region20: #{octave_conv2_forward.1} parent=11 // pred_fallthru
        _
      // Predicated region
      $region21: #{octave_conv2_forward.1} parent=11 // pred_check
        %p306 = pneg %p107
      $region22: #{octave_conv2_forward.1} parent=11 // pred_check_branch
        %308 = sbr.rel (%p306) target = $region24
      $region23: #{octave_conv2_forward.1} parent=11 // pred_region
        _
      $region24: #{octave_conv2_forward.1} parent=11 // pred_fallthru
        _
      // Predicated region
      $region25: #{octave_conv2_forward.1} parent=11 // pred_check
        %p309 = pneg %p128
      $region26: #{octave_conv2_forward.1} parent=11 // pred_check_branch
        %311 = sbr.rel (%p309) target = $region28
      $region27: #{octave_conv2_forward.1} parent=11 // pred_region
        _
      $region28: #{octave_conv2_forward.1} parent=11 // pred_fallthru
        _
      // Predicated region
      $region29: #{octave_conv2_forward.1} parent=11 // pred_check
        %p312 = pneg %p149
      $region30: #{octave_conv2_forward.1} parent=11 // pred_check_branch
        %314 = sbr.rel (%p312) target = $region32
      $region31: #{octave_conv2_forward.1} parent=11 // pred_region
        _
      $region32: #{octave_conv2_forward.1} parent=11 // pred_fallthru
        _
      // Predicated region
      $region33: #{octave_conv2_forward.1} parent=11 // pred_check
        %p315 = pneg %p170
      $region34: #{octave_conv2_forward.1} parent=11 // pred_check_branch
        %317 = sbr.rel (%p315) target = $region36
      $region35: #{octave_conv2_forward.1} parent=11 // pred_region
        _
      $region36: #{octave_conv2_forward.1} parent=11 // pred_fallthru
        _
      // Predicated region
      $region37: #{octave_conv2_forward.1} parent=11 // pred_check
        %p318 = pneg %p191
      $region38: #{octave_conv2_forward.1} parent=11 // pred_check_branch
        %320 = sbr.rel (%p318) target = $region40
      $region39: #{octave_conv2_forward.1} parent=11 // pred_region
        _
      $region40: #{octave_conv2_forward.1} parent=11 // pred_fallthru
        _
      // Predicated region
      $region41: #{octave_conv2_forward.1} parent=11 // pred_check
        %p321 = pneg %p212
      $region42: #{octave_conv2_forward.1} parent=11 // pred_check_branch
        %323 = sbr.rel (%p321) target = $region44
      $region43: #{octave_conv2_forward.1} parent=11 // pred_region
        _
      $region44: #{octave_conv2_forward.1} parent=11 // pred_fallthru
        _
      // Predicated region
      $region45: #{octave_conv2_forward.1} parent=11 // pred_check
        %p324 = pneg %p233
      $region46: #{octave_conv2_forward.1} parent=11 // pred_check_branch
        %326 = sbr.rel (%p324) target = $region48
      $region47: #{octave_conv2_forward.1} parent=11 // pred_region
        _
      $region48: #{octave_conv2_forward.1} parent=11 // pred_fallthru
        _
    $region12: #{octave_conv2_forward.1} parent=5 // pred_fallthru
      _
    %p327 = scmp.lt.s32.totalorder %s18, 2
    // Predicated region
    $region49: #{octave_conv2_forward.1} parent=5 // pred_check
      %p328 = pneg %p327
    $region50: #{octave_conv2_forward.1} parent=5 // pred_check_branch
      %330 = sbr.rel (%p328) target = $region52
    $region51: #{octave_conv2_forward.1} parent=5 // pred_region
      // Predicated region
      $region53: #{octave_conv2_forward.1} parent=51 // pred_check
        %p331 = pneg %p38
      $region54: #{octave_conv2_forward.1} parent=51 // pred_check_branch
        %333 = sbr.rel (%p331) target = $region56
      $region55: #{octave_conv2_forward.1} parent=51 // pred_region
        %s334 = smul.u32 32, %s18
        %p335 = scmp.lt.s32.totalorder %s334, 63
        %s336 = scalar_select %p335, %s334, 63
        %s337 = smul.addr %s336, 2
        %s338 = smul.addr %s337, 4
        %s339 = scalar_lea.vmem %s0, %s338
        %s340 = smul.u32 32, %s18
      $region56: #{octave_conv2_forward.1} parent=51 // pred_fallthru
        _
    $region52: #{octave_conv2_forward.1} parent=5 // pred_fallthru
      _
    %p341 = scmp.le.s32.totalorder 1, %s18
    %p342 = scmp.lt.s32.totalorder %s18, 3
    %p343 = pnand %p341, %p342
    %p344 = pneg %p343
    // Predicated region
    $region57: #{octave_conv2_forward.1} parent=5 // pred_check
      _
    $region58: #{octave_conv2_forward.1} parent=5 // pred_check_branch
      %346 = sbr.rel (%p343) target = $region60
    $region59: #{octave_conv2_forward.1} parent=5 // pred_region
      %s347 = ssub.s32 %s18, 1
      %s348 = smul.u32 32, %s23
      %p349 = scmp.lt.s32.totalorder %s348, 63
      %s350 = scalar_select %p349, %s348, 63
      %s351 = smul.addr %s350, 2
      %s352 = smul.addr %s351, 4
      %s353 = scalar_lea.vmem %s0, %s352
      %p354 = pneg %p44
      %p355 = pneg %p41
      %p356 = pneg %p65
      %p357 = pneg %p62
      %p358 = pneg %p86
      %p359 = pneg %p83
      %p360 = pneg %p107
      %p361 = pneg %p104
      %p362 = pneg %p128
      %p363 = pneg %p125
      %p364 = pneg %p149
      %p365 = pneg %p146
      %p366 = pneg %p170
      %p367 = pneg %p167
      %p368 = pneg %p191
      %p369 = pneg %p188
      %p370 = pneg %p212
      %p371 = pneg %p209
      %p372 = pneg %p233
      %p373 = pneg %p230
      %p374 = pneg %p259
      %p375 = pneg %p256
      %p376 = scmp.lt.s32.totalorder %s23, 1
      %s377 = scalar_select %p376, %s23, 1
      %s378 = smul.addr %s377, 2
      %s379 = smul.addr %s378, 4
      %s380 = scalar_lea.vmem %s10, %s379
      %p381 = pneg %p285
      %p382 = pneg %p282
      %p383 = scmp.lt.s32.totalorder %s23, 1
      %s384 = scalar_select %p383, %s23, 1
      %s385 = smul.addr %s384, 2
      %s386 = smul.addr %s385, 8
      %s387 = scalar_lea.vmem %s11, %s386
      %s388 = smul.u32 32, %s23
      %p389 = scmp.lt.s32.totalorder %s388, 63
      %s390 = scalar_select %p389, %s388, 63
      %s391 = smul.addr %s390, 2
      %s392 = smul.addr %s391, 4
      %s393 = scalar_lea.vmem %s0, %s392
      %s394 = smul.u32 32, %s23
      %p395 = scmp.lt.s32.totalorder %s23, 1
      %s396 = scalar_select %p395, %s23, 1
      %s397 = smul.addr %s396, 2
      %s398 = smul.addr %s397, 4
      %s399 = scalar_lea.vmem %s10, %s398
      %p400 = scmp.lt.s32.totalorder %s23, 1
      %s401 = scalar_select %p400, %s23, 1
      %s402 = smul.addr %s401, 2
      %s403 = smul.addr %s402, 8
      %s404 = scalar_lea.vmem %s11, %s403
      %v406 = vld [vmem:[%s393] sm:$0xff]
      %v407 = vld [vmem:[%s393 + $0x8] sm:$0xff]
      %v408 = vld [vmem:[%s393 + $0x10] sm:$0xff]
      %v409 = vld [vmem:[%s393 + $0x18] sm:$0xff]
      %v410 = vld [vmem:[%s393 + $0x20] sm:$0xff]
      %v411 = vld [vmem:[%s393 + $0x28] sm:$0xff]
      %v412 = vld [vmem:[%s393 + $0x30] sm:$0xff]
      %v413 = vld [vmem:[%s393 + $0x38] sm:$0xff]
      %v414 = vld [vmem:[%s393 + $0x40] sm:$0xff]
      %v415 = vld [vmem:[%s393 + $0x48] sm:$0xff]
      %v416 = vld [vmem:[%s393 + $0x50] sm:$0xff]
      %v417 = vld [vmem:[%s393 + $0x58] sm:$0xff]
      %v418 = vld [vmem:[%s393 + $0x60] sm:$0xff]
      %v419 = vld [vmem:[%s393 + $0x68] sm:$0xff]
      %v420 = vld [vmem:[%s393 + $0x70] sm:$0xff]
      %v421 = vld [vmem:[%s393 + $0x78] sm:$0xff]
      %v422 = vld [vmem:[%s393 + $0x80] sm:$0xff]
      %v423 = vld [vmem:[%s393 + $0x88] sm:$0xff]
      %v424 = vld [vmem:[%s393 + $0x90] sm:$0xff]
      %v425 = vld [vmem:[%s393 + $0x98] sm:$0xff]
      %v426 = vld [vmem:[%s393 + $0xa0] sm:$0xff]
      %v427 = vld [vmem:[%s393 + $0xa8] sm:$0xff]
      %v428 = vld [vmem:[%s393 + $0xb0] sm:$0xff]
      %v429 = vld [vmem:[%s393 + $0xb8] sm:$0xff]
      %v430 = vld [vmem:[%s393 + $0xc0] sm:$0xff]
      %v431 = vld [vmem:[%s393 + $0xc8] sm:$0xff]
      %v432 = vld [vmem:[%s393 + $0xd0] sm:$0xff]
      %v433 = vld [vmem:[%s393 + $0xd8] sm:$0xff]
      %v434 = vld [vmem:[%s393 + $0xe0] sm:$0xff]
      %v435 = vld [vmem:[%s393 + $0xe8] sm:$0xff]
      %v436 = vld [vmem:[%s393 + $0xf0] sm:$0xff]
      %v437 = vld [vmem:[%s393 + $0xf8] sm:$0xff]
      %v438 = vld [vmem:[%s3] sm:$0xf]
      %v439 = vld [vmem:[%s3 + $0x4] sm:$0xf]
      %v440 = vld [vmem:[%s3 + $0x8] sm:$0xf]
      %v441 = vld [vmem:[%s3 + $0xc] sm:$0xf]
      %v442 = vld [vmem:[%s3 + $0x10] sm:$0xf]
      %v443 = vld [vmem:[%s3 + $0x14] sm:$0xf]
      %v444 = vld [vmem:[%s3 + $0x18] sm:$0xf]
      %v445 = vld [vmem:[%s3 + $0x1c] sm:$0xf]
      %v446 = vld [vmem:[%s3 + $0x20] sm:$0xf]
      %v447 = vld [vmem:[%s3 + $0x24] sm:$0xf]
      %v448 = vld [vmem:[%s3 + $0x28] sm:$0xf]
      %v449 = vld [vmem:[%s3 + $0x2c] sm:$0xf]
      %v450 = vld [vmem:[%s3 + $0x30] sm:$0xf]
      %v451 = vld [vmem:[%s3 + $0x34] sm:$0xf]
      %v452 = vld [vmem:[%s3 + $0x38] sm:$0xf]
      %v453 = vld [vmem:[%s3 + $0x3c] sm:$0xf]
      %v454 = vld [vmem:[%s3 + $0x40] sm:$0xf]
      %v455 = vld [vmem:[%s3 + $0x44] sm:$0xf]
      %v456 = vld [vmem:[%s3 + $0x48] sm:$0xf]
      %v457 = vld [vmem:[%s3 + $0x4c] sm:$0xf]
      %v458 = vld [vmem:[%s3 + $0x50] sm:$0xf]
      %v459 = vld [vmem:[%s3 + $0x54] sm:$0xf]
      %v460 = vld [vmem:[%s3 + $0x58] sm:$0xf]
      %v461 = vld [vmem:[%s3 + $0x5c] sm:$0xf]
      %v462 = vld [vmem:[%s3 + $0x60] sm:$0xf]
      %v463 = vld [vmem:[%s3 + $0x64] sm:$0xf]
      %v464 = vld [vmem:[%s3 + $0x68] sm:$0xf]
      %v465 = vld [vmem:[%s3 + $0x6c] sm:$0xf]
      %v466 = vld [vmem:[%s3 + $0x70] sm:$0xf]
      %v467 = vld [vmem:[%s3 + $0x74] sm:$0xf]
      %v468 = vld [vmem:[%s3 + $0x78] sm:$0xf]
      %v469 = vld [vmem:[%s3 + $0x7c] sm:$0xf]
      %v502 = vunpack.c.l.b16 %v406
      %v503 = vunpack.c.h.b16 %v406
      %v504 = vunpack.c.l.b16 %v407
      %v505 = vunpack.c.h.b16 %v407
      %v506 = vunpack.c.l.b16 %v408
      %v507 = vunpack.c.h.b16 %v408
      %v508 = vunpack.c.l.b16 %v409
      %v509 = vunpack.c.h.b16 %v409
      %v510 = vunpack.c.l.b16 %v410
      %v511 = vunpack.c.h.b16 %v410
      %v512 = vunpack.c.l.b16 %v411
      %v513 = vunpack.c.h.b16 %v411
      %v514 = vunpack.c.l.b16 %v412
      %v515 = vunpack.c.h.b16 %v412
      %v516 = vunpack.c.l.b16 %v413
      %v517 = vunpack.c.h.b16 %v413
      %v518 = vunpack.c.l.b16 %v414
      %v519 = vunpack.c.h.b16 %v414
      %v520 = vunpack.c.l.b16 %v415
      %v521 = vunpack.c.h.b16 %v415
      %v522 = vunpack.c.l.b16 %v416
      %v523 = vunpack.c.h.b16 %v416
      %v524 = vunpack.c.l.b16 %v417
      %v525 = vunpack.c.h.b16 %v417
      %v526 = vunpack.c.l.b16 %v418
      %v527 = vunpack.c.h.b16 %v418
      %v528 = vunpack.c.l.b16 %v419
      %v529 = vunpack.c.h.b16 %v419
      %v530 = vunpack.c.l.b16 %v420
      %v531 = vunpack.c.h.b16 %v420
      %v532 = vunpack.c.l.b16 %v421
      %v533 = vunpack.c.h.b16 %v421
      %v534 = vunpack.c.l.b16 %v422
      %v535 = vunpack.c.h.b16 %v422
      %v536 = vunpack.c.l.b16 %v423
      %v537 = vunpack.c.h.b16 %v423
      %v538 = vunpack.c.l.b16 %v424
      %v539 = vunpack.c.h.b16 %v424
      %v540 = vunpack.c.l.b16 %v425
      %v541 = vunpack.c.h.b16 %v425
      %v542 = vunpack.c.l.b16 %v426
      %v543 = vunpack.c.h.b16 %v426
      %v544 = vunpack.c.l.b16 %v427
      %v545 = vunpack.c.h.b16 %v427
      %v546 = vunpack.c.l.b16 %v428
      %v547 = vunpack.c.h.b16 %v428
      %v548 = vunpack.c.l.b16 %v429
      %v549 = vunpack.c.h.b16 %v429
      %v550 = vunpack.c.l.b16 %v430
      %v551 = vunpack.c.h.b16 %v430
      %v552 = vunpack.c.l.b16 %v431
      %v553 = vunpack.c.h.b16 %v431
      %v554 = vunpack.c.l.b16 %v432
      %v555 = vunpack.c.h.b16 %v432
      %v556 = vunpack.c.l.b16 %v433
      %v557 = vunpack.c.h.b16 %v433
      %v558 = vunpack.c.l.b16 %v434
      %v559 = vunpack.c.h.b16 %v434
      %v560 = vunpack.c.l.b16 %v435
      %v561 = vunpack.c.h.b16 %v435
      %v562 = vunpack.c.l.b16 %v436
      %v563 = vunpack.c.h.b16 %v436
      %v564 = vunpack.c.l.b16 %v437
      %v565 = vunpack.c.h.b16 %v437
      %v566 = vpack.c.b16 %v504, %v502
      %v567 = vpack.c.b16 %v505, %v503
      %v568 = vpack.c.b16 %v508, %v506
      %v569 = vpack.c.b16 %v509, %v507
      %v570 = vpack.c.b16 %v512, %v510
      %v571 = vpack.c.b16 %v513, %v511
      %v572 = vpack.c.b16 %v516, %v514
      %v573 = vpack.c.b16 %v517, %v515
      %v574 = vpack.c.b16 %v520, %v518
      %v575 = vpack.c.b16 %v521, %v519
      %v576 = vpack.c.b16 %v524, %v522
      %v577 = vpack.c.b16 %v525, %v523
      %v578 = vpack.c.b16 %v528, %v526
      %v579 = vpack.c.b16 %v529, %v527
      %v580 = vpack.c.b16 %v532, %v530
      %v581 = vpack.c.b16 %v533, %v531
      %v582 = vpack.c.b16 %v536, %v534
      %v583 = vpack.c.b16 %v537, %v535
      %v584 = vpack.c.b16 %v540, %v538
      %v585 = vpack.c.b16 %v541, %v539
      %v586 = vpack.c.b16 %v544, %v542
      %v587 = vpack.c.b16 %v545, %v543
      %v588 = vpack.c.b16 %v548, %v546
      %v589 = vpack.c.b16 %v549, %v547
      %v590 = vpack.c.b16 %v552, %v550
      %v591 = vpack.c.b16 %v553, %v551
      %v592 = vpack.c.b16 %v556, %v554
      %v593 = vpack.c.b16 %v557, %v555
      %v594 = vpack.c.b16 %v560, %v558
      %v595 = vpack.c.b16 %v561, %v559
      %v596 = vpack.c.b16 %v564, %v562
      %v597 = vpack.c.b16 %v565, %v563
      %v662 = vunpack.c.l.b16 %v438
      %v663 = vunpack.c.l.b16 %v439
      %v664 = vunpack.c.l.b16 %v440
      %v665 = vunpack.c.l.b16 %v441
      %v666 = vunpack.c.l.b16 %v442
      %v667 = vunpack.c.l.b16 %v443
      %v668 = vunpack.c.l.b16 %v444
      %v669 = vunpack.c.l.b16 %v445
      %v670 = vunpack.c.l.b16 %v446
      %v671 = vunpack.c.l.b16 %v447
      %v672 = vunpack.c.l.b16 %v448
      %v673 = vunpack.c.l.b16 %v449
      %v674 = vunpack.c.l.b16 %v450
      %v675 = vunpack.c.l.b16 %v451
      %v676 = vunpack.c.l.b16 %v452
      %v677 = vunpack.c.l.b16 %v453
      %v678 = vunpack.c.l.b16 %v454
      %v679 = vunpack.c.l.b16 %v455
      %v680 = vunpack.c.l.b16 %v456
      %v681 = vunpack.c.l.b16 %v457
      %v682 = vunpack.c.l.b16 %v458
      %v683 = vunpack.c.l.b16 %v459
      %v684 = vunpack.c.l.b16 %v460
      %v685 = vunpack.c.l.b16 %v461
      %v686 = vunpack.c.l.b16 %v462
      %v687 = vunpack.c.l.b16 %v463
      %v688 = vunpack.c.l.b16 %v464
      %v689 = vunpack.c.l.b16 %v465
      %v690 = vunpack.c.l.b16 %v466
      %v691 = vunpack.c.l.b16 %v467
      %v692 = vunpack.c.l.b16 %v468
      %v693 = vunpack.c.l.b16 %v469
      %v694 = vpack.c.b16 %v663, %v662
      %v695 = vpack.c.b16 %v665, %v664
      %v696 = vpack.c.b16 %v667, %v666
      %v697 = vpack.c.b16 %v669, %v668
      %v698 = vpack.c.b16 %v671, %v670
      %v699 = vpack.c.b16 %v673, %v672
      %v700 = vpack.c.b16 %v675, %v674
      %v701 = vpack.c.b16 %v677, %v676
      %v702 = vpack.c.b16 %v679, %v678
      %v703 = vpack.c.b16 %v681, %v680
      %v704 = vpack.c.b16 %v683, %v682
      %v705 = vpack.c.b16 %v685, %v684
      %v706 = vpack.c.b16 %v687, %v686
      %v707 = vpack.c.b16 %v689, %v688
      %v708 = vpack.c.b16 %v691, %v690
      %v709 = vpack.c.b16 %v693, %v692
      %726 = vmatprep.subr.bf16.mxu0 0
      %727 = vmatpush1.bf16.msra.mxu0 %v694
      %728 = vmatprep.subr.bf16.mxu0 0
      %729 = vmatpush1.bf16.msra.mxu0 %v695
      %730 = vmatprep.subr.bf16.mxu0 0
      %731 = vmatpush1.bf16.msra.mxu0 %v696
      %732 = vmatprep.subr.bf16.mxu0 0
      %733 = vmatpush1.bf16.msra.mxu0 %v697
      %734 = vmatprep.subr.bf16.mxu0 0
      %735 = vmatpush1.bf16.msra.mxu0 %v698
      %736 = vmatprep.subr.bf16.mxu0 0
      %737 = vmatpush1.bf16.msra.mxu0 %v699
      %738 = vmatprep.subr.bf16.mxu0 0
      %739 = vmatpush1.bf16.msra.mxu0 %v700
      %740 = vmatprep.subr.bf16.mxu0 0
      %741 = vmatpush1.bf16.msra.mxu0 %v701
      %742 = vmatprep.subr.bf16.mxu0 0
      %743 = vmatpush1.bf16.msra.mxu0 %v702
      %744 = vmatprep.subr.bf16.mxu0 0
      %745 = vmatpush1.bf16.msra.mxu0 %v703
      %746 = vmatprep.subr.bf16.mxu0 0
      %747 = vmatpush1.bf16.msra.mxu0 %v704
      %748 = vmatprep.subr.bf16.mxu0 0
      %749 = vmatpush1.bf16.msra.mxu0 %v705
      %750 = vmatprep.subr.bf16.mxu0 0
      %751 = vmatpush1.bf16.msra.mxu0 %v706
      %752 = vmatprep.subr.bf16.mxu0 0
      %753 = vmatpush1.bf16.msra.mxu0 %v707
      %754 = vmatprep.subr.bf16.mxu0 0
      %755 = vmatpush1.bf16.msra.mxu0 %v708
      %756 = vmatprep.subr.bf16.mxu0 0
      %757 = vmatpush1.bf16.msra.mxu0 %v709
      %758 = vmatprep.mubr.bf16.mxu0 %v567
      %759 = vmatmul.mubr.bf16.gmra.mrb[0].mxu0 %v566
      %v760 = vpop.f32.mrb[0].mxu0
      %v761 = vadd.f32 0.0, %v760
      %v762 = vpop.f32.mrb[0].mxu0
      %v763 = vpop.f32.mrb[0].mxu0
      %v764 = vadd.f32 0.0, %v763
      %v765 = vpop.f32.mrb[0].mxu0
      %766 = vmatprep.mubr.bf16.mxu0 %v569
      %767 = vmatmul.mubr.bf16.gmra.mrb[0].mxu0 %v568
      %v768 = vpop.f32.mrb[0].mxu0
      %v769 = vadd.f32 0.0, %v768
      %v770 = vpop.f32.mrb[0].mxu0
      %v771 = vpop.f32.mrb[0].mxu0
      %v772 = vadd.f32 0.0, %v771
      %v773 = vpop.f32.mrb[0].mxu0
      %774 = vmatprep.mubr.bf16.mxu0 %v571
      %775 = vmatmul.mubr.bf16.gmra.mrb[0].mxu0 %v570
      %v776 = vpop.f32.mrb[0].mxu0
      %v777 = vadd.f32 0.0, %v776
      %v778 = vpop.f32.mrb[0].mxu0
      %v779 = vpop.f32.mrb[0].mxu0
      %v780 = vadd.f32 0.0, %v779
      %v781 = vpop.f32.mrb[0].mxu0
      %782 = vmatprep.mubr.bf16.mxu0 %v573
      %783 = vmatmul.mubr.bf16.gmra.mrb[0].mxu0 %v572
      %v784 = vpop.f32.mrb[0].mxu0
      %v785 = vadd.f32 0.0, %v784
      %v786 = vpop.f32.mrb[0].mxu0
      %v787 = vpop.f32.mrb[0].mxu0
      %v788 = vadd.f32 0.0, %v787
      %v789 = vpop.f32.mrb[0].mxu0
      %790 = vmatprep.mubr.bf16.mxu0 %v575
      %791 = vmatmul.mubr.bf16.gmra.mrb[0].mxu0 %v574
      %v792 = vpop.f32.mrb[0].mxu0
      %v793 = vadd.f32 0.0, %v792
      %v794 = vpop.f32.mrb[0].mxu0
      %v795 = vpop.f32.mrb[0].mxu0
      %v796 = vadd.f32 0.0, %v795
      %v797 = vpop.f32.mrb[0].mxu0
      %798 = vmatprep.mubr.bf16.mxu0 %v577
      %799 = vmatmul.mubr.bf16.gmra.mrb[0].mxu0 %v576
      %v800 = vpop.f32.mrb[0].mxu0
      %v801 = vadd.f32 0.0, %v800
      %v802 = vpop.f32.mrb[0].mxu0
      %v803 = vpop.f32.mrb[0].mxu0
      %v804 = vadd.f32 0.0, %v803
      %v805 = vpop.f32.mrb[0].mxu0
      %806 = vmatprep.mubr.bf16.mxu0 %v579
      %807 = vmatmul.mubr.bf16.gmra.mrb[0].mxu0 %v578
      %v808 = vpop.f32.mrb[0].mxu0
      %v809 = vadd.f32 0.0, %v808
      %v810 = vpop.f32.mrb[0].mxu0
      %v811 = vpop.f32.mrb[0].mxu0
      %v812 = vadd.f32 0.0, %v811
      %v813 = vpop.f32.mrb[0].mxu0
      %814 = vmatprep.mubr.bf16.mxu0 %v581
      %815 = vmatmul.mubr.bf16.gmra.mrb[0].mxu0 %v580
      %v816 = vpop.f32.mrb[0].mxu0
      %v817 = vadd.f32 0.0, %v816
      %v818 = vpop.f32.mrb[0].mxu0
      %v819 = vpop.f32.mrb[0].mxu0
      %v820 = vadd.f32 0.0, %v819
      %v821 = vpop.f32.mrb[0].mxu0
      %822 = vmatprep.mubr.bf16.mxu0 %v583
      %823 = vmatmul.mubr.bf16.gmra.mrb[0].mxu0 %v582
      %v824 = vpop.f32.mrb[0].mxu0
      %v825 = vadd.f32 0.0, %v824
      %v826 = vpop.f32.mrb[0].mxu0
      %v827 = vpop.f32.mrb[0].mxu0
      %v828 = vadd.f32 0.0, %v827
      %v829 = vpop.f32.mrb[0].mxu0
      %830 = vmatprep.mubr.bf16.mxu0 %v585
      %831 = vmatmul.mubr.bf16.gmra.mrb[0].mxu0 %v584
      %v832 = vpop.f32.mrb[0].mxu0
      %v833 = vadd.f32 0.0, %v832
      %v834 = vpop.f32.mrb[0].mxu0
      %v835 = vpop.f32.mrb[0].mxu0
      %v836 = vadd.f32 0.0, %v835
      %v837 = vpop.f32.mrb[0].mxu0
      %838 = vmatprep.mubr.bf16.mxu0 %v587
      %839 = vmatmul.mubr.bf16.gmra.mrb[0].mxu0 %v586
      %v840 = vpop.f32.mrb[0].mxu0
      %v841 = vadd.f32 0.0, %v840
      %v842 = vpop.f32.mrb[0].mxu0
      %v843 = vpop.f32.mrb[0].mxu0
      %v844 = vadd.f32 0.0, %v843
      %v845 = vpop.f32.mrb[0].mxu0
      %846 = vmatprep.mubr.bf16.mxu0 %v589
      %847 = vmatmul.mubr.bf16.gmra.mrb[0].mxu0 %v588
      %v848 = vpop.f32.mrb[0].mxu0
      %v849 = vadd.f32 0.0, %v848
      %v850 = vpop.f32.mrb[0].mxu0
      %v851 = vpop.f32.mrb[0].mxu0
      %v852 = vadd.f32 0.0, %v851
      %v853 = vpop.f32.mrb[0].mxu0
      %854 = vmatprep.mubr.bf16.mxu0 %v591
      %855 = vmatmul.mubr.bf16.gmra.mrb[0].mxu0 %v590
      %v856 = vpop.f32.mrb[0].mxu0
      %v857 = vadd.f32 0.0, %v856
      %v858 = vpop.f32.mrb[0].mxu0
      %v859 = vpop.f32.mrb[0].mxu0
      %v860 = vadd.f32 0.0, %v859
      %v861 = vpop.f32.mrb[0].mxu0
      %862 = vmatprep.mubr.bf16.mxu0 %v593
      %863 = vmatmul.mubr.bf16.gmra.mrb[0].mxu0 %v592
      %v864 = vpop.f32.mrb[0].mxu0
      %v865 = vadd.f32 0.0, %v864
      %v866 = vpop.f32.mrb[0].mxu0
      %v867 = vpop.f32.mrb[0].mxu0
      %v868 = vadd.f32 0.0, %v867
      %v869 = vpop.f32.mrb[0].mxu0
      %870 = vmatprep.mubr.bf16.mxu0 %v595
      %871 = vmatmul.mubr.bf16.gmra.mrb[0].mxu0 %v594
      %v872 = vpop.f32.mrb[0].mxu0
      %v873 = vadd.f32 0.0, %v872
      %v874 = vpop.f32.mrb[0].mxu0
      %v875 = vpop.f32.mrb[0].mxu0
      %v876 = vadd.f32 0.0, %v875
      %v877 = vpop.f32.mrb[0].mxu0
      %878 = vmatprep.mubr.bf16.mxu0 %v597
      %879 = vmatmul.mubr.bf16.gmra.mrb[0].mxu0 %v596
      %v880 = vpop.f32.mrb[0].mxu0
      %v881 = vadd.f32 0.0, %v880
      %v882 = vpop.f32.mrb[0].mxu0
      %v883 = vpop.f32.mrb[0].mxu0
      %v884 = vadd.f32 0.0, %v883
      %v885 = vpop.f32.mrb[0].mxu0
      %886 = vdwg.mxu0
      %v887 = vpack.c.bf16 %v764, %v761
      %v888 = vpack.c.bf16 %v772, %v769
      %v889 = vpack.c.bf16 %v780, %v777
      %v890 = vpack.c.bf16 %v788, %v785
      %v891 = vpack.c.bf16 %v796, %v793
      %v892 = vpack.c.bf16 %v804, %v801
      %v893 = vpack.c.bf16 %v812, %v809
      %v894 = vpack.c.bf16 %v820, %v817
      %v895 = vpack.c.bf16 %v828, %v825
      %v896 = vpack.c.bf16 %v836, %v833
      %v897 = vpack.c.bf16 %v844, %v841
      %v898 = vpack.c.bf16 %v852, %v849
      %v899 = vpack.c.bf16 %v860, %v857
      %v900 = vpack.c.bf16 %v868, %v865
      %v901 = vpack.c.bf16 %v876, %v873
      %v902 = vpack.c.bf16 %v884, %v881
      %v903 = vld [vmem:[%s1] sm:$0xf]
      %v904 = vld [vmem:[%s1 + $0x4] sm:$0xf]
      %v905 = vld [vmem:[%s1 + $0x8] sm:$0xf]
      %v906 = vld [vmem:[%s1 + $0xc] sm:$0xf]
      %v907 = vld [vmem:[%s1 + $0x10] sm:$0xf]
      %v908 = vld [vmem:[%s1 + $0x14] sm:$0xf]
      %v909 = vld [vmem:[%s1 + $0x18] sm:$0xf]
      %v910 = vld [vmem:[%s1 + $0x1c] sm:$0xf]
      %v911 = vld [vmem:[%s1 + $0x20] sm:$0xf]
      %v921 = vunpack.c.l.b16 %v903
      %v922 = vunpack.c.l.b16 %v904
      %v923 = vunpack.c.l.b16 %v905
      %v924 = vunpack.c.l.b16 %v906
      %v925 = vunpack.c.l.b16 %v907
      %v926 = vunpack.c.l.b16 %v908
      %v927 = vunpack.c.l.b16 %v909
      %v928 = vunpack.c.l.b16 %v910
      %v929 = vunpack.c.l.b16 %v911
      %v930 = vpack.c.b16 %v922, %v921
      %v931 = vpack.c.b16 %v924, %v923
      %v932 = vpack.c.b16 %v926, %v925
      %v933 = vpack.c.b16 %v928, %v927
      %v934 = vpack.c.b16 %v929, %v929
      %vm935 = vcmask 523264
      %v937 = vsel %vm935, %v930, 0
      %v940 = vsel %vm935, %v931, 0
      %v943 = vsel %vm935, %v932, 0
      %v946 = vsel %vm935, %v933, 0
      %v949 = vsel %vm935, %v934, 0
      %951 = vmatprep.subr.bf16.mxu0 %v567
      %952 = vmatpush1.bf16.msra.mxu0 %v566
      %953 = vmatprep.subr.bf16.mxu0 %v569
      %954 = vmatpush1.bf16.msra.mxu0 %v568
      %955 = vmatprep.subr.bf16.mxu0 %v571
      %956 = vmatpush1.bf16.msra.mxu0 %v570
      %957 = vmatprep.subr.bf16.mxu0 %v573
      %958 = vmatpush1.bf16.msra.mxu0 %v572
      %959 = vmatprep.subr.bf16.mxu0 0
      %960 = vmatpush1.bf16.msra.mxu0 0
      %961 = vmatprep.subr.bf16.mxu0 0
      %962 = vmatpush1.bf16.msra.mxu0 0
      %963 = vmatprep.subr.bf16.mxu0 0
      %964 = vmatpush1.bf16.msra.mxu0 0
      %965 = vmatprep.subr.bf16.mxu0 0
      %966 = vmatpush1.bf16.msra.mxu0 0
      %967 = vmatprep.subr.bf16.mxu0 0
      %968 = vmatpush1.bf16.msra.mxu0 0
      %969 = vmatprep.subr.bf16.mxu0 0
      %970 = vmatpush1.bf16.msra.mxu0 0
      %971 = vmatprep.subr.bf16.mxu0 0
      %972 = vmatpush1.bf16.msra.mxu0 0
      %973 = vmatprep.subr.bf16.mxu0 0
      %974 = vmatpush1.bf16.msra.mxu0 0
      %975 = vmatprep.subr.bf16.mxu0 0
      %976 = vmatpush1.bf16.msra.mxu0 0
      %977 = vmatprep.subr.bf16.mxu0 0
      %978 = vmatpush1.bf16.msra.mxu0 0
      %979 = vmatprep.subr.bf16.mxu0 0
      %980 = vmatpush1.bf16.msra.mxu0 0
      %981 = vmatprep.subr.bf16.mxu0 0
      %982 = vmatpush1.bf16.msra.mxu0 0
      %983 = vmatprep.mubr.bf16.mxu0 0
      %984 = vmatmul.mubr.bf16.gmra.mrb[0].mxu0 %v937
      %v985 = vpop.f32.mrb[0].mxu0
      %v986 = vadd.f32 0.0, %v985
      %v987 = vpop.f32.mrb[0].mxu0
      %v988 = vadd.f32 0.0, %v987
      %v989 = vpop.f32.mrb[0].mxu0
      %v990 = vadd.f32 0.0, %v989
      %v991 = vpop.f32.mrb[0].mxu0
      %v992 = vadd.f32 0.0, %v991
      %993 = vmatprep.mubr.bf16.mxu0 0
      %994 = vmatmul.mubr.bf16.gmra.mrb[0].mxu0 %v940
      %v995 = vpop.f32.mrb[0].mxu0
      %v996 = vadd.f32 0.0, %v995
      %v997 = vpop.f32.mrb[0].mxu0
      %v998 = vadd.f32 0.0, %v997
      %v999 = vpop.f32.mrb[0].mxu0
      %v1000 = vadd.f32 0.0, %v999
      %v1001 = vpop.f32.mrb[0].mxu0
      %v1002 = vadd.f32 0.0, %v1001
      %1003 = vmatprep.mubr.bf16.mxu0 0
      %1004 = vmatmul.mubr.bf16.gmra.mrb[0].mxu0 %v943
      %v1005 = vpop.f32.mrb[0].mxu0
      %v1006 = vadd.f32 0.0, %v1005
      %v1007 = vpop.f32.mrb[0].mxu0
      %v1008 = vadd.f32 0.0, %v1007
      %v1009 = vpop.f32.mrb[0].mxu0
      %v1010 = vadd.f32 0.0, %v1009
      %v1011 = vpop.f32.mrb[0].mxu0
      %v1012 = vadd.f32 0.0, %v1011
      %1013 = vmatprep.mubr.bf16.mxu0 0
      %1014 = vmatmul.mubr.bf16.gmra.mrb[0].mxu0 %v946
      %v1015 = vpop.f32.mrb[0].mxu0
      %v1016 = vadd.f32 0.0, %v1015
      %v1017 = vpop.f32.mrb[0].mxu0
      %v1018 = vadd.f32 0.0, %v1017
      %v1019 = vpop.f32.mrb[0].mxu0
      %v1020 = vadd.f32 0.0, %v1019
      %v1021 = vpop.f32.mrb[0].mxu0
      %v1022 = vadd.f32 0.0, %v1021
      %1023 = vmatprep.mubr.bf16.mxu0 0
      %1024 = vmatmul.mubr.bf16.gmra.mrb[0].mxu0 %v949
      %v1025 = vpop.f32.mrb[0].mxu0
      %v1026 = vadd.f32 0.0, %v1025
      %v1027 = vpop.f32.mrb[0].mxu0
      %v1028 = vadd.f32 0.0, %v1027
      %v1029 = vpop.f32.mrb[0].mxu0
      %v1030 = vpop.f32.mrb[0].mxu0
      %1031 = vdwg.mxu0
      %v1032 = vld [vmem:[%s4] sm:$0xff]
      %v1033 = vld [vmem:[%s4 + $0x8] sm:$0xff]
      %v1034 = vld [vmem:[%s4 + $0x10] sm:$0xff]
      %v1035 = vld [vmem:[%s4 + $0x18] sm:$0xff]
      %v1036 = vld [vmem:[%s4 + $0x20] sm:$0xff]
      %v1037 = vld [vmem:[%s4 + $0x28] sm:$0xff]
      %v1038 = vld [vmem:[%s4 + $0x30] sm:$0xff]
      %v1039 = vld [vmem:[%s4 + $0x38] sm:$0xff]
      %v1040 = vld [vmem:[%s4 + $0x40] sm:$0xff]
      %v1041 = vld [vmem:[%s4 + $0x48] sm:$0xff]
      %v1042 = vld [vmem:[%s4 + $0x50] sm:$0xff]
      %v1043 = vld [vmem:[%s4 + $0x58] sm:$0xff]
      %v1044 = vld [vmem:[%s4 + $0x60] sm:$0xff]
      %v1045 = vld [vmem:[%s4 + $0x68] sm:$0xff]
      %v1046 = vld [vmem:[%s4 + $0x70] sm:$0xff]
      %v1047 = vld [vmem:[%s4 + $0x78] sm:$0xff]
      %v1048 = vld [vmem:[%s4 + $0x80] sm:$0xff]
      %v1049 = vld [vmem:[%s4 + $0x88] sm:$0xff]
      %v1050 = vld [vmem:[%s4 + $0x90] sm:$0xff]
      %v1051 = vld [vmem:[%s4 + $0x98] sm:$0xff]
      %v1052 = vld [vmem:[%s4 + $0xa0] sm:$0xff]
      %v1053 = vld [vmem:[%s4 + $0xa8] sm:$0xff]
      %v1054 = vld [vmem:[%s4 + $0xb0] sm:$0xff]
      %v1055 = vld [vmem:[%s4 + $0xb8] sm:$0xff]
      %v1056 = vld [vmem:[%s4 + $0xc0] sm:$0xff]
      %v1057 = vld [vmem:[%s4 + $0xc8] sm:$0xff]
      %v1058 = vld [vmem:[%s4 + $0xd0] sm:$0xff]
      %v1059 = vld [vmem:[%s4 + $0xd8] sm:$0xff]
      %v1060 = vld [vmem:[%s4 + $0xe0] sm:$0xff]
      %v1061 = vld [vmem:[%s4 + $0xe8] sm:$0xff]
      %v1062 = vld [vmem:[%s4 + $0xf0] sm:$0xff]
      %v1063 = vld [vmem:[%s4 + $0xf8] sm:$0xff]
      %v1064 = vld [vmem:[%s4 + $0x100] sm:$0xff]
      %v1065 = vld [vmem:[%s4 + $0x108] sm:$0xff]
      %v1066 = vld [vmem:[%s4 + $0x110] sm:$0xff]
      %v1067 = vld [vmem:[%s4 + $0x118] sm:$0xff]
      %v1068 = vld [vmem:[%s4 + $0x120] sm:$0xff]
      %v1069 = vld [vmem:[%s4 + $0x128] sm:$0xff]
      %v1070 = vld [vmem:[%s4 + $0x130] sm:$0xff]
      %v1071 = vld [vmem:[%s4 + $0x138] sm:$0xff]
      %v1072 = vld [vmem:[%s4 + $0x140] sm:$0xff]
      %v1073 = vld [vmem:[%s4 + $0x148] sm:$0xff]
      %v1074 = vld [vmem:[%s4 + $0x150] sm:$0xff]
      %v1075 = vld [vmem:[%s4 + $0x158] sm:$0xff]
      %v1076 = vld [vmem:[%s4 + $0x160] sm:$0xff]
      %v1077 = vld [vmem:[%s4 + $0x168] sm:$0xff]
      %v1078 = vld [vmem:[%s4 + $0x170] sm:$0xff]
      %v1079 = vld [vmem:[%s4 + $0x178] sm:$0xff]
      %v1080 = vld [vmem:[%s4 + $0x180] sm:$0xff]
      %v1081 = vld [vmem:[%s4 + $0x188] sm:$0xff]
      %v1082 = vld [vmem:[%s4 + $0x190] sm:$0xff]
      %v1083 = vld [vmem:[%s4 + $0x198] sm:$0xff]
      %v1084 = vld [vmem:[%s4 + $0x1a0] sm:$0xff]
      %v1085 = vld [vmem:[%s4 + $0x1a8] sm:$0xff]
      %v1086 = vld [vmem:[%s4 + $0x1b0] sm:$0xff]
      %v1087 = vld [vmem:[%s4 + $0x1b8] sm:$0xff]
      %v1088 = vld [vmem:[%s4 + $0x1c0] sm:$0xff]
      %v1089 = vld [vmem:[%s4 + $0x1c8] sm:$0xff]
      %v1090 = vld [vmem:[%s4 + $0x1d0] sm:$0xff]
      %v1091 = vld [vmem:[%s4 + $0x1d8] sm:$0xff]
      %v1092 = vld [vmem:[%s4 + $0x1e0] sm:$0xff]
      %v1093 = vld [vmem:[%s4 + $0x1e8] sm:$0xff]
      %v1094 = vld [vmem:[%s4 + $0x1f0] sm:$0xff]
      %v1095 = vld [vmem:[%s4 + $0x1f8] sm:$0xff]
      %v1096 = vld [vmem:[%s4 + $0x200] sm:$0xff]
      %v1097 = vld [vmem:[%s4 + $0x208] sm:$0xff]
      %v1098 = vld [vmem:[%s4 + $0x210] sm:$0xff]
      %v1099 = vld [vmem:[%s4 + $0x218] sm:$0xff]
      %v1100 = vld [vmem:[%s4 + $0x220] sm:$0xff]
      %v1101 = vld [vmem:[%s4 + $0x228] sm:$0xff]
      %v1102 = vld [vmem:[%s4 + $0x230] sm:$0xff]
      %v1103 = vld [vmem:[%s4 + $0x238] sm:$0xff]
      %v1104 = vld [vmem:[%s4 + $0x240] sm:$0xff]
      %v1105 = vld [vmem:[%s4 + $0x248] sm:$0xff]
      %v1106 = vld [vmem:[%s4 + $0x250] sm:$0xff]
      %v1107 = vld [vmem:[%s4 + $0x258] sm:$0xff]
      %v1108 = vld [vmem:[%s4 + $0x260] sm:$0xff]
      %v1109 = vld [vmem:[%s4 + $0x268] sm:$0xff]
      %v1110 = vld [vmem:[%s4 + $0x270] sm:$0xff]
      %v1111 = vld [vmem:[%s4 + $0x278] sm:$0xff]
      %v1112 = vld [vmem:[%s4 + $0x280] sm:$0xff]
      %v1113 = vld [vmem:[%s4 + $0x288] sm:$0xff]
      %v1114 = vld [vmem:[%s4 + $0x290] sm:$0xff]
      %v1115 = vld [vmem:[%s4 + $0x298] sm:$0xff]
      %v1116 = vld [vmem:[%s4 + $0x2a0] sm:$0xff]
      %v1117 = vld [vmem:[%s4 + $0x2a8] sm:$0xff]
      %v1118 = vld [vmem:[%s4 + $0x2b0] sm:$0xff]
      %v1119 = vld [vmem:[%s4 + $0x2b8] sm:$0xff]
      %v1120 = vld [vmem:[%s4 + $0x2c0] sm:$0xff]
      %v1121 = vld [vmem:[%s4 + $0x2c8] sm:$0xff]
      %v1122 = vld [vmem:[%s4 + $0x2d0] sm:$0xff]
      %v1123 = vld [vmem:[%s4 + $0x2d8] sm:$0xff]
      %v1124 = vld [vmem:[%s4 + $0x2e0] sm:$0xff]
      %v1125 = vld [vmem:[%s4 + $0x2e8] sm:$0xff]
      %v1126 = vld [vmem:[%s4 + $0x2f0] sm:$0xff]
      %v1127 = vld [vmem:[%s4 + $0x2f8] sm:$0xff]
      %1128 = vmatprep.subr.mxu0 %v1033
      %1129 = vmatpush1.msra.mxu0 %v1032
      %1130 = vmatprep.subr.mxu0 %v1036
      %1131 = vmatpush1.msra.mxu0 %v1035
      %1132 = vmatprep.subr.mxu0 %v1039
      %1133 = vmatpush1.msra.mxu0 %v1038
      %1134 = vmatprep.subr.mxu0 %v1042
      %1135 = vmatpush1.msra.mxu0 %v1041
      %1136 = vmatprep.subr.mxu0 %v1045
      %1137 = vmatpush1.msra.mxu0 %v1044
      %1138 = vmatprep.subr.mxu0 %v1048
      %1139 = vmatpush1.msra.mxu0 %v1047
      %1140 = vmatprep.subr.mxu0 %v1051
      %1141 = vmatpush1.msra.mxu0 %v1050
      %1142 = vmatprep.subr.mxu0 %v1054
      %1143 = vmatpush1.msra.mxu0 %v1053
      %1144 = vmatprep.subr.mxu0 %v1057
      %1145 = vmatpush1.msra.mxu0 %v1056
      %1146 = vmatprep.subr.mxu0 %v1060
      %1147 = vmatpush1.msra.mxu0 %v1059
      %1148 = vmatprep.subr.mxu0 %v1063
      %1149 = vmatpush1.msra.mxu0 %v1062
      %1150 = vmatprep.subr.mxu0 %v1066
      %1151 = vmatpush1.msra.mxu0 %v1065
      %1152 = vmatprep.subr.mxu0 %v1069
      %1153 = vmatpush1.msra.mxu0 %v1068
      %1154 = vmatprep.subr.mxu0 %v1072
      %1155 = vmatpush1.msra.mxu0 %v1071
      %1156 = vmatprep.subr.mxu0 %v1075
      %1157 = vmatpush1.msra.mxu0 %v1074
      %1158 = vmatprep.subr.mxu0 %v1078
      %1159 = vmatpush1.msra.mxu0 %v1077
      %1160 = vmatprep.subr.mxu0 %v1081
      %1161 = vmatpush1.msra.mxu0 %v1080
      %1162 = vmatprep.subr.mxu0 %v1084
      %1163 = vmatpush1.msra.mxu0 %v1083
      %1164 = vmatprep.subr.mxu0 %v1087
      %1165 = vmatpush1.msra.mxu0 %v1086
      %1166 = vmatprep.subr.mxu0 %v1090
      %1167 = vmatpush1.msra.mxu0 %v1089
      %1168 = vmatprep.subr.mxu0 %v1093
      %1169 = vmatpush1.msra.mxu0 %v1092
      %1170 = vmatprep.subr.mxu0 %v1096
      %1171 = vmatpush1.msra.mxu0 %v1095
      %1172 = vmatprep.subr.mxu0 %v1099
      %1173 = vmatpush1.msra.mxu0 %v1098
      %1174 = vmatprep.subr.mxu0 %v1102
      %1175 = vmatpush1.msra.mxu0 %v1101
      %1176 = vmatprep.subr.mxu0 %v1105
      %1177 = vmatpush1.msra.mxu0 %v1104
      %1178 = vmatprep.subr.mxu0 %v1108
      %1179 = vmatpush1.msra.mxu0 %v1107
      %1180 = vmatprep.subr.mxu0 %v1111
      %1181 = vmatpush1.msra.mxu0 %v1110
      %1182 = vmatprep.subr.mxu0 %v1114
      %1183 = vmatpush1.msra.mxu0 %v1113
      %1184 = vmatprep.subr.mxu0 %v1117
      %1185 = vmatpush1.msra.mxu0 %v1116
      %1186 = vmatprep.subr.mxu0 %v1120
      %1187 = vmatpush1.msra.mxu0 %v1119
      %1188 = vmatprep.subr.mxu0 %v1123
      %1189 = vmatpush1.msra.mxu0 %v1122
      %1190 = vmatprep.subr.mxu0 %v1126
      %1191 = vmatpush1.msra.mxu0 %v1125
      %1192 = vmatprep.mubr.f32.mxu0 %v988
      %1193 = vmatmul.mubr.f32.gmra.mrb[0].mxu0 %v986
      %v1194 = vpop.f32.mrb[0].mxu0
      %v1195 = vadd.f32 0.0, %v1194
      %v1196 = vpop.f32.mrb[0].mxu0
      %v1197 = vadd.f32 0.0, %v1196
      %1198 = vmatprep.mubr.f32.mxu0 %v992
      %1199 = vmatmul.mubr.f32.gmra.mrb[0].mxu0 %v990
      %v1200 = vpop.f32.mrb[0].mxu0
      %v1201 = vadd.f32 0.0, %v1200
      %v1202 = vpop.f32.mrb[0].mxu0
      %v1203 = vadd.f32 0.0, %v1202
      %1204 = vmatprep.mubr.f32.mxu0 %v998
      %1205 = vmatmul.mubr.f32.gmra.mrb[0].mxu0 %v996
      %v1206 = vpop.f32.mrb[0].mxu0
      %v1207 = vadd.f32 0.0, %v1206
      %v1208 = vpop.f32.mrb[0].mxu0
      %v1209 = vadd.f32 0.0, %v1208
      %1210 = vmatprep.mubr.f32.mxu0 %v1002
      %1211 = vmatmul.mubr.f32.gmra.mrb[0].mxu0 %v1000
      %v1212 = vpop.f32.mrb[0].mxu0
      %v1213 = vadd.f32 0.0, %v1212
      %v1214 = vpop.f32.mrb[0].mxu0
      %v1215 = vadd.f32 0.0, %v1214
      %1216 = vmatprep.mubr.f32.mxu0 %v1008
      %1217 = vmatmul.mubr.f32.gmra.mrb[0].mxu0 %v1006
      %v1218 = vpop.f32.mrb[0].mxu0
      %v1219 = vadd.f32 0.0, %v1218
      %v1220 = vpop.f32.mrb[0].mxu0
      %v1221 = vadd.f32 0.0, %v1220
      %1222 = vmatprep.mubr.f32.mxu0 %v1012
      %1223 = vmatmul.mubr.f32.gmra.mrb[0].mxu0 %v1010
      %v1224 = vpop.f32.mrb[0].mxu0
      %v1225 = vadd.f32 0.0, %v1224
      %v1226 = vpop.f32.mrb[0].mxu0
      %v1227 = vadd.f32 0.0, %v1226
      %1228 = vmatprep.mubr.f32.mxu0 %v1018
      %1229 = vmatmul.mubr.f32.gmra.mrb[0].mxu0 %v1016
      %v1230 = vpop.f32.mrb[0].mxu0
      %v1231 = vadd.f32 0.0, %v1230
      %v1232 = vpop.f32.mrb[0].mxu0
      %v1233 = vadd.f32 0.0, %v1232
      %1234 = vmatprep.mubr.f32.mxu0 %v1022
      %1235 = vmatmul.mubr.f32.gmra.mrb[0].mxu0 %v1020
      %v1236 = vpop.f32.mrb[0].mxu0
      %v1237 = vadd.f32 0.0, %v1236
      %v1238 = vpop.f32.mrb[0].mxu0
      %v1239 = vadd.f32 0.0, %v1238
      %1240 = vmatprep.mubr.f32.mxu0 %v1028
      %1241 = vmatmul.mubr.f32.gmra.mrb[0].mxu0 %v1026
      %v1242 = vpop.f32.mrb[0].mxu0
      %v1243 = vadd.f32 0.0, %v1242
      %v1244 = vpop.f32.mrb[0].mxu0
      %v1245 = vadd.f32 0.0, %v1244
      %1246 = vdwg.mxu0
      %1247 = vmatprep.subr.mxu0 0.0
      %1248 = vmatpush1.msra.mxu0 %v1034
      %1249 = vmatprep.subr.mxu0 0.0
      %1250 = vmatpush1.msra.mxu0 %v1037
      %1251 = vmatprep.subr.mxu0 0.0
      %1252 = vmatpush1.msra.mxu0 %v1040
      %1253 = vmatprep.subr.mxu0 0.0
      %1254 = vmatpush1.msra.mxu0 %v1043
      %1255 = vmatprep.subr.mxu0 0.0
      %1256 = vmatpush1.msra.mxu0 %v1046
      %1257 = vmatprep.subr.mxu0 0.0
      %1258 = vmatpush1.msra.mxu0 %v1049
      %1259 = vmatprep.subr.mxu0 0.0
      %1260 = vmatpush1.msra.mxu0 %v1052
      %1261 = vmatprep.subr.mxu0 0.0
      %1262 = vmatpush1.msra.mxu0 %v1055
      %1263 = vmatprep.subr.mxu0 0.0
      %1264 = vmatpush1.msra.mxu0 %v1058
      %1265 = vmatprep.subr.mxu0 0.0
      %1266 = vmatpush1.msra.mxu0 %v1061
      %1267 = vmatprep.subr.mxu0 0.0
      %1268 = vmatpush1.msra.mxu0 %v1064
      %1269 = vmatprep.subr.mxu0 0.0
      %1270 = vmatpush1.msra.mxu0 %v1067
      %1271 = vmatprep.subr.mxu0 0.0
      %1272 = vmatpush1.msra.mxu0 %v1070
      %1273 = vmatprep.subr.mxu0 0.0
      %1274 = vmatpush1.msra.mxu0 %v1073
      %1275 = vmatprep.subr.mxu0 0.0
      %1276 = vmatpush1.msra.mxu0 %v1076
      %1277 = vmatprep.subr.mxu0 0.0
      %1278 = vmatpush1.msra.mxu0 %v1079
      %1279 = vmatprep.subr.mxu0 0.0
      %1280 = vmatpush1.msra.mxu0 %v1082
      %1281 = vmatprep.subr.mxu0 0.0
      %1282 = vmatpush1.msra.mxu0 %v1085
      %1283 = vmatprep.subr.mxu0 0.0
      %1284 = vmatpush1.msra.mxu0 %v1088
      %1285 = vmatprep.subr.mxu0 0.0
      %1286 = vmatpush1.msra.mxu0 %v1091
      %1287 = vmatprep.subr.mxu0 0.0
      %1288 = vmatpush1.msra.mxu0 %v1094
      %1289 = vmatprep.subr.mxu0 0.0
      %1290 = vmatpush1.msra.mxu0 %v1097
      %1291 = vmatprep.subr.mxu0 0.0
      %1292 = vmatpush1.msra.mxu0 %v1100
      %1293 = vmatprep.subr.mxu0 0.0
      %1294 = vmatpush1.msra.mxu0 %v1103
      %1295 = vmatprep.subr.mxu0 0.0
      %1296 = vmatpush1.msra.mxu0 %v1106
      %1297 = vmatprep.subr.mxu0 0.0
      %1298 = vmatpush1.msra.mxu0 %v1109
      %1299 = vmatprep.subr.mxu0 0.0
      %1300 = vmatpush1.msra.mxu0 %v1112
      %1301 = vmatprep.subr.mxu0 0.0
      %1302 = vmatpush1.msra.mxu0 %v1115
      %1303 = vmatprep.subr.mxu0 0.0
      %1304 = vmatpush1.msra.mxu0 %v1118
      %1305 = vmatprep.subr.mxu0 0.0
      %1306 = vmatpush1.msra.mxu0 %v1121
      %1307 = vmatprep.subr.mxu0 0.0
      %1308 = vmatpush1.msra.mxu0 %v1124
      %1309 = vmatprep.subr.mxu0 0.0
      %1310 = vmatpush1.msra.mxu0 %v1127
      %1311 = vmatprep.mubr.f32.mxu0 %v988
      %1312 = vmatmul.mubr.f32.gmra.mrb[0].mxu0 %v986
      %v1313 = vpop.f32.mrb[0].mxu0
      %v1314 = vadd.f32 0.0, %v1313
      %v1315 = vpop.f32.mrb[0].mxu0
      %1316 = vmatprep.mubr.f32.mxu0 %v992
      %1317 = vmatmul.mubr.f32.gmra.mrb[0].mxu0 %v990
      %v1318 = vpop.f32.mrb[0].mxu0
      %v1319 = vadd.f32 0.0, %v1318
      %v1320 = vpop.f32.mrb[0].mxu0
      %1321 = vmatprep.mubr.f32.mxu0 %v998
      %1322 = vmatmul.mubr.f32.gmra.mrb[0].mxu0 %v996
      %v1323 = vpop.f32.mrb[0].mxu0
      %v1324 = vadd.f32 0.0, %v1323
      %v1325 = vpop.f32.mrb[0].mxu0
      %1326 = vmatprep.mubr.f32.mxu0 %v1002
      %1327 = vmatmul.mubr.f32.gmra.mrb[0].mxu0 %v1000
      %v1328 = vpop.f32.mrb[0].mxu0
      %v1329 = vadd.f32 0.0, %v1328
      %v1330 = vpop.f32.mrb[0].mxu0
      %1331 = vmatprep.mubr.f32.mxu0 %v1008
      %1332 = vmatmul.mubr.f32.gmra.mrb[0].mxu0 %v1006
      %v1333 = vpop.f32.mrb[0].mxu0
      %v1334 = vadd.f32 0.0, %v1333
      %v1335 = vpop.f32.mrb[0].mxu0
      %1336 = vmatprep.mubr.f32.mxu0 %v1012
      %1337 = vmatmul.mubr.f32.gmra.mrb[0].mxu0 %v1010
      %v1338 = vpop.f32.mrb[0].mxu0
      %v1339 = vadd.f32 0.0, %v1338
      %v1340 = vpop.f32.mrb[0].mxu0
      %1341 = vmatprep.mubr.f32.mxu0 %v1018
      %1342 = vmatmul.mubr.f32.gmra.mrb[0].mxu0 %v1016
      %v1343 = vpop.f32.mrb[0].mxu0
      %v1344 = vadd.f32 0.0, %v1343
      %v1345 = vpop.f32.mrb[0].mxu0
      %1346 = vmatprep.mubr.f32.mxu0 %v1022
      %1347 = vmatmul.mubr.f32.gmra.mrb[0].mxu0 %v1020
      %v1348 = vpop.f32.mrb[0].mxu0
      %v1349 = vadd.f32 0.0, %v1348
      %v1350 = vpop.f32.mrb[0].mxu0
      %1351 = vmatprep.mubr.f32.mxu0 %v1028
      %1352 = vmatmul.mubr.f32.gmra.mrb[0].mxu0 %v1026
      %v1353 = vpop.f32.mrb[0].mxu0
      %v1354 = vadd.f32 0.0, %v1353
      %v1355 = vpop.f32.mrb[0].mxu0
      %1356 = vdwg.mxu0
      %v1357 = vld [vmem:[%s2] sm:$0xff]
      %v1358 = vld [vmem:[%s2 + $0x8] sm:$0xff]
      %v1359 = vld [vmem:[%s2 + $0x10] sm:$0xff]
      %v1360 = vld [vmem:[%s2 + $0x18] sm:$0xff]
      %v1361 = vld [vmem:[%s2 + $0x20] sm:$0xff]
      %v1362 = vld [vmem:[%s2 + $0x28] sm:$0xff]
      %v1363 = vld [vmem:[%s2 + $0x30] sm:$0xff]
      %v1364 = vld [vmem:[%s2 + $0x38] sm:$0xff]
      %v1365 = vld [vmem:[%s2 + $0x40] sm:$0xff]
      %v1366 = vld [vmem:[%s2 + $0x48] sm:$0xff]
      %v1367 = vld [vmem:[%s2 + $0x50] sm:$0xff]
      %v1368 = vld [vmem:[%s2 + $0x58] sm:$0xff]
      %v1369 = vld [vmem:[%s2 + $0x60] sm:$0xff]
      %v1370 = vld [vmem:[%s2 + $0x68] sm:$0xff]
      %v1371 = vld [vmem:[%s2 + $0x70] sm:$0xff]
      %v1372 = vld [vmem:[%s2 + $0x78] sm:$0xff]
      %v1373 = vld [vmem:[%s2 + $0x80] sm:$0xff]
      %v1374 = vld [vmem:[%s2 + $0x88] sm:$0xff]
      %v1375 = vld [vmem:[%s2 + $0x90] sm:$0xff]
      %v1376 = vld [vmem:[%s2 + $0x98] sm:$0xff]
      %v1377 = vld [vmem:[%s2 + $0xa0] sm:$0xff]
      %v1378 = vld [vmem:[%s2 + $0xa8] sm:$0xff]
      %v1379 = vld [vmem:[%s2 + $0xb0] sm:$0xff]
      %v1380 = vld [vmem:[%s2 + $0xb8] sm:$0xff]
      %v1381 = vld [vmem:[%s2 + $0xc0] sm:$0xff]
      %v1382 = vld [vmem:[%s2 + $0xc8] sm:$0xff]
      %v1383 = vld [vmem:[%s2 + $0xd0] sm:$0xff]
      %v1384 = vld [vmem:[%s2 + $0xd8] sm:$0xff]
      %v1385 = vld [vmem:[%s2 + $0xe0] sm:$0xff]
      %v1386 = vld [vmem:[%s2 + $0xe8] sm:$0xff]
      %v1387 = vld [vmem:[%s2 + $0xf0] sm:$0xff]
      %v1388 = vld [vmem:[%s2 + $0xf8] sm:$0xff]
      %v1389 = vld [vmem:[%s2 + $0x100] sm:$0xff]
      %v1390 = vld [vmem:[%s2 + $0x108] sm:$0xff]
      %v1391 = vld [vmem:[%s2 + $0x110] sm:$0xff]
      %v1392 = vld [vmem:[%s2 + $0x118] sm:$0xff]
      %v1393 = vld [vmem:[%s2 + $0x120] sm:$0xff]
      %v1394 = vld [vmem:[%s2 + $0x128] sm:$0xff]
      %v1395 = vld [vmem:[%s2 + $0x130] sm:$0xff]
      %v1396 = vld [vmem:[%s2 + $0x138] sm:$0xff]
      %v1397 = vld [vmem:[%s2 + $0x140] sm:$0xff]
      %v1398 = vld [vmem:[%s2 + $0x148] sm:$0xff]
      %v1399 = vld [vmem:[%s2 + $0x150] sm:$0xff]
      %v1400 = vld [vmem:[%s2 + $0x158] sm:$0xff]
      %v1401 = vld [vmem:[%s2 + $0x160] sm:$0xff]
      %v1447 = vunpack.c.l.b16 %v1357
      %v1448 = vunpack.c.h.b16 %v1357
      %v1449 = vunpack.c.l.b16 %v1358
      %v1450 = vunpack.c.h.b16 %v1358
      %v1451 = vunpack.c.l.b16 %v1359
      %v1452 = vunpack.c.h.b16 %v1359
      %v1453 = vunpack.c.l.b16 %v1360
      %v1454 = vunpack.c.h.b16 %v1360
      %v1455 = vunpack.c.l.b16 %v1361
      %v1456 = vunpack.c.h.b16 %v1361
      %v1457 = vunpack.c.l.b16 %v1362
      %v1458 = vunpack.c.h.b16 %v1362
      %v1459 = vunpack.c.l.b16 %v1363
      %v1460 = vunpack.c.h.b16 %v1363
      %v1461 = vunpack.c.l.b16 %v1364
      %v1462 = vunpack.c.h.b16 %v1364
      %v1463 = vunpack.c.l.b16 %v1365
      %v1464 = vunpack.c.h.b16 %v1365
      %v1465 = vunpack.c.l.b16 %v1366
      %v1466 = vunpack.c.h.b16 %v1366
      %v1467 = vunpack.c.l.b16 %v1367
      %v1468 = vunpack.c.h.b16 %v1367
      %v1469 = vunpack.c.l.b16 %v1368
      %v1470 = vunpack.c.h.b16 %v1368
      %v1471 = vunpack.c.l.b16 %v1369
      %v1472 = vunpack.c.h.b16 %v1369
      %v1473 = vunpack.c.l.b16 %v1370
      %v1474 = vunpack.c.h.b16 %v1370
      %v1475 = vunpack.c.l.b16 %v1371
      %v1476 = vunpack.c.h.b16 %v1371
      %v1477 = vunpack.c.l.b16 %v1372
      %v1478 = vunpack.c.h.b16 %v1372
      %v1479 = vunpack.c.l.b16 %v1373
      %v1480 = vunpack.c.h.b16 %v1373
      %v1481 = vunpack.c.l.b16 %v1374
      %v1482 = vunpack.c.h.b16 %v1374
      %v1483 = vunpack.c.l.b16 %v1375
      %v1484 = vunpack.c.h.b16 %v1375
      %v1485 = vunpack.c.l.b16 %v1376
      %v1486 = vunpack.c.h.b16 %v1376
      %v1487 = vunpack.c.l.b16 %v1377
      %v1488 = vunpack.c.h.b16 %v1377
      %v1489 = vunpack.c.l.b16 %v1378
      %v1490 = vunpack.c.h.b16 %v1378
      %v1491 = vunpack.c.l.b16 %v1379
      %v1492 = vunpack.c.h.b16 %v1379
      %v1493 = vunpack.c.l.b16 %v1380
      %v1494 = vunpack.c.h.b16 %v1380
      %v1495 = vunpack.c.l.b16 %v1381
      %v1496 = vunpack.c.h.b16 %v1381
      %v1497 = vunpack.c.l.b16 %v1382
      %v1498 = vunpack.c.h.b16 %v1382
      %v1499 = vunpack.c.l.b16 %v1383
      %v1500 = vunpack.c.h.b16 %v1383
      %v1501 = vunpack.c.l.b16 %v1384
      %v1502 = vunpack.c.h.b16 %v1384
      %v1503 = vunpack.c.l.b16 %v1385
      %v1504 = vunpack.c.h.b16 %v1385
      %v1505 = vunpack.c.l.b16 %v1386
      %v1506 = vunpack.c.h.b16 %v1386
      %v1507 = vunpack.c.l.b16 %v1387
      %v1508 = vunpack.c.h.b16 %v1387
      %v1509 = vunpack.c.l.b16 %v1388
      %v1510 = vunpack.c.h.b16 %v1388
      %v1511 = vunpack.c.l.b16 %v1389
      %v1512 = vunpack.c.h.b16 %v1389
      %v1513 = vunpack.c.l.b16 %v1390
      %v1514 = vunpack.c.h.b16 %v1390
      %v1515 = vunpack.c.l.b16 %v1391
      %v1516 = vunpack.c.h.b16 %v1391
      %v1517 = vunpack.c.l.b16 %v1392
      %v1518 = vunpack.c.h.b16 %v1392
      %v1519 = vunpack.c.l.b16 %v1393
      %v1520 = vunpack.c.h.b16 %v1393
      %v1521 = vunpack.c.l.b16 %v1394
      %v1522 = vunpack.c.h.b16 %v1394
      %v1523 = vunpack.c.l.b16 %v1395
      %v1524 = vunpack.c.h.b16 %v1395
      %v1525 = vunpack.c.l.b16 %v1396
      %v1526 = vunpack.c.h.b16 %v1396
      %v1527 = vunpack.c.l.b16 %v1397
      %v1528 = vunpack.c.h.b16 %v1397
      %v1529 = vunpack.c.l.b16 %v1398
      %v1530 = vunpack.c.h.b16 %v1398
      %v1531 = vunpack.c.l.b16 %v1399
      %v1532 = vunpack.c.h.b16 %v1399
      %v1533 = vunpack.c.l.b16 %v1400
      %v1534 = vunpack.c.h.b16 %v1400
      %v1535 = vunpack.c.l.b16 %v1401
      %v1536 = vunpack.c.h.b16 %v1401
      %v1537 = vpack.c.b16 %v1449, %v1447
      %v1538 = vpack.c.b16 %v1450, %v1448
      %v1539 = vpack.c.b16 %v1453, %v1451
      %v1540 = vpack.c.b16 %v1454, %v1452
      %v1541 = vpack.c.b16 %v1457, %v1455
      %v1542 = vpack.c.b16 %v1458, %v1456
      %v1543 = vpack.c.b16 %v1461, %v1459
      %v1544 = vpack.c.b16 %v1462, %v1460
      %v1545 = vpack.c.b16 %v1465, %v1463
      %v1546 = vpack.c.b16 %v1466, %v1464
      %v1547 = vpack.c.b16 %v1469, %v1467
      %v1548 = vpack.c.b16 %v1470, %v1468
      %v1549 = vpack.c.b16 %v1473, %v1471
      %v1550 = vpack.c.b16 %v1474, %v1472
      %v1551 = vpack.c.b16 %v1477, %v1475
      %v1552 = vpack.c.b16 %v1478, %v1476
      %v1553 = vpack.c.b16 %v1481, %v1479
      %v1554 = vpack.c.b16 %v1482, %v1480
      %v1555 = vpack.c.b16 %v1485, %v1483
      %v1556 = vpack.c.b16 %v1486, %v1484
      %v1557 = vpack.c.b16 %v1489, %v1487
      %v1558 = vpack.c.b16 %v1490, %v1488
      %v1559 = vpack.c.b16 %v1493, %v1491
      %v1560 = vpack.c.b16 %v1494, %v1492
      %v1561 = vpack.c.b16 %v1497, %v1495
      %v1562 = vpack.c.b16 %v1498, %v1496
      %v1563 = vpack.c.b16 %v1501, %v1499
      %v1564 = vpack.c.b16 %v1502, %v1500
      %v1565 = vpack.c.b16 %v1505, %v1503
      %v1566 = vpack.c.b16 %v1506, %v1504
      %v1567 = vpack.c.b16 %v1509, %v1507
      %v1568 = vpack.c.b16 %v1510, %v1508
      %v1569 = vpack.c.b16 %v1513, %v1511
      %v1570 = vpack.c.b16 %v1514, %v1512
      %v1571 = vpack.c.b16 %v1517, %v1515
      %v1572 = vpack.c.b16 %v1518, %v1516
      %v1573 = vpack.c.b16 %v1521, %v1519
      %v1574 = vpack.c.b16 %v1522, %v1520
      %v1575 = vpack.c.b16 %v1525, %v1523
      %v1576 = vpack.c.b16 %v1526, %v1524
      %v1577 = vpack.c.b16 %v1529, %v1527
      %v1578 = vpack.c.b16 %v1530, %v1528
      %v1579 = vpack.c.b16 %v1533, %v1531
      %v1580 = vpack.c.b16 %v1534, %v1532
      %v1581 = vpack.c.b16 %v1535, %v1535
      %v1582 = vpack.c.b16 %v1536, %v1536
      %1629 = vmatprep.subr.bf16.mxu0 0
      %1630 = vmatpush1.bf16.msra.mxu0 %v887
      %1631 = vmatprep.subr.bf16.mxu0 0
      %1632 = vmatpush1.bf16.msra.mxu0 %v888
      %1633 = vmatprep.subr.bf16.mxu0 0
      %1634 = vmatpush1.bf16.msra.mxu0 %v889
      %1635 = vmatprep.subr.bf16.mxu0 0
      %1636 = vmatpush1.bf16.msra.mxu0 %v890
      %1637 = vmatprep.subr.bf16.mxu0 0
      %1638 = vmatpush1.bf16.msra.mxu0 %v891
      %1639 = vmatprep.subr.bf16.mxu0 0
      %1640 = vmatpush1.bf16.msra.mxu0 %v892
      %1641 = vmatprep.subr.bf16.mxu0 0
      %1642 = vmatpush1.bf16.msra.mxu0 %v893
      %1643 = vmatprep.subr.bf16.mxu0 0
      %1644 = vmatpush1.bf16.msra.mxu0 %v894
      %1645 = vmatprep.subr.bf16.mxu0 0
      %1646 = vmatpush1.bf16.msra.mxu0 %v895
      %1647 = vmatprep.subr.bf16.mxu0 0
      %1648 = vmatpush1.bf16.msra.mxu0 %v896
      %1649 = vmatprep.subr.bf16.mxu0 0
      %1650 = vmatpush1.bf16.msra.mxu0 %v897
      %1651 = vmatprep.subr.bf16.mxu0 0
      %1652 = vmatpush1.bf16.msra.mxu0 %v898
      %1653 = vmatprep.subr.bf16.mxu0 0
      %1654 = vmatpush1.bf16.msra.mxu0 %v899
      %1655 = vmatprep.subr.bf16.mxu0 0
      %1656 = vmatpush1.bf16.msra.mxu0 %v900
      %1657 = vmatprep.subr.bf16.mxu0 0
      %1658 = vmatpush1.bf16.msra.mxu0 %v901
      %1659 = vmatprep.subr.bf16.mxu0 0
      %1660 = vmatpush1.bf16.msra.mxu0 %v902
      %1661 = vmatprep.mubr.bf16.mxu0 %v1538
      %1662 = vmatmul.mubr.bf16.gmra.mrb[0].mxu0 %v1537
      %v1663 = vpop.f32.mrb[0].mxu0
      %v1664 = vadd.f32 0.0, %v1663
      %v1665 = vpop.f32.mrb[0].mxu0
      %v1666 = vpop.f32.mrb[0].mxu0
      %v1667 = vadd.f32 0.0, %v1666
      %v1668 = vpop.f32.mrb[0].mxu0
      %1669 = vmatprep.mubr.bf16.mxu0 %v1540
      %1670 = vmatmul.mubr.bf16.gmra.mrb[0].mxu0 %v1539
      %v1671 = vpop.f32.mrb[0].mxu0
      %v1672 = vadd.f32 0.0, %v1671
      %v1673 = vpop.f32.mrb[0].mxu0
      %v1674 = vpop.f32.mrb[0].mxu0
      %v1675 = vadd.f32 0.0, %v1674
      %v1676 = vpop.f32.mrb[0].mxu0
      %1677 = vmatprep.mubr.bf16.mxu0 %v1542
      %1678 = vmatmul.mubr.bf16.gmra.mrb[0].mxu0 %v1541
      %v1679 = vpop.f32.mrb[0].mxu0
      %v1680 = vadd.f32 0.0, %v1679
      %v1681 = vpop.f32.mrb[0].mxu0
      %v1682 = vpop.f32.mrb[0].mxu0
      %v1683 = vadd.f32 0.0, %v1682
      %v1684 = vpop.f32.mrb[0].mxu0
      %1685 = vmatprep.mubr.bf16.mxu0 %v1544
      %1686 = vmatmul.mubr.bf16.gmra.mrb[0].mxu0 %v1543
      %v1687 = vpop.f32.mrb[0].mxu0
      %v1688 = vadd.f32 0.0, %v1687
      %v1689 = vpop.f32.mrb[0].mxu0
      %v1690 = vpop.f32.mrb[0].mxu0
      %v1691 = vadd.f32 0.0, %v1690
      %v1692 = vpop.f32.mrb[0].mxu0
      %1693 = vmatprep.mubr.bf16.mxu0 %v1546
      %1694 = vmatmul.mubr.bf16.gmra.mrb[0].mxu0 %v1545
      %v1695 = vpop.f32.mrb[0].mxu0
      %v1696 = vadd.f32 0.0, %v1695
      %v1697 = vpop.f32.mrb[0].mxu0
      %v1698 = vpop.f32.mrb[0].mxu0
      %v1699 = vadd.f32 0.0, %v1698
      %v1700 = vpop.f32.mrb[0].mxu0
      %1701 = vmatprep.mubr.bf16.mxu0 %v1548
      %1702 = vmatmul.mubr.bf16.gmra.mrb[0].mxu0 %v1547
      %v1703 = vpop.f32.mrb[0].mxu0
      %v1704 = vadd.f32 0.0, %v1703
      %v1705 = vpop.f32.mrb[0].mxu0
      %v1706 = vpop.f32.mrb[0].mxu0
      %v1707 = vadd.f32 0.0, %v1706
      %v1708 = vpop.f32.mrb[0].mxu0
      %1709 = vmatprep.mubr.bf16.mxu0 %v1550
      %1710 = vmatmul.mubr.bf16.gmra.mrb[0].mxu0 %v1549
      %v1711 = vpop.f32.mrb[0].mxu0
      %v1712 = vadd.f32 0.0, %v1711
      %v1713 = vpop.f32.mrb[0].mxu0
      %v1714 = vpop.f32.mrb[0].mxu0
      %v1715 = vadd.f32 0.0, %v1714
      %v1716 = vpop.f32.mrb[0].mxu0
      %1717 = vmatprep.mubr.bf16.mxu0 %v1552
      %1718 = vmatmul.mubr.bf16.gmra.mrb[0].mxu0 %v1551
      %v1719 = vpop.f32.mrb[0].mxu0
      %v1720 = vadd.f32 0.0, %v1719
      %v1721 = vpop.f32.mrb[0].mxu0
      %v1722 = vpop.f32.mrb[0].mxu0
      %v1723 = vadd.f32 0.0, %v1722
      %v1724 = vpop.f32.mrb[0].mxu0
      %1725 = vmatprep.mubr.bf16.mxu0 %v1554
      %1726 = vmatmul.mubr.bf16.gmra.mrb[0].mxu0 %v1553
      %v1727 = vpop.f32.mrb[0].mxu0
      %v1728 = vadd.f32 0.0, %v1727
      %v1729 = vpop.f32.mrb[0].mxu0
      %v1730 = vpop.f32.mrb[0].mxu0
      %v1731 = vadd.f32 0.0, %v1730
      %v1732 = vpop.f32.mrb[0].mxu0
      %1733 = vmatprep.mubr.bf16.mxu0 %v1556
      %1734 = vmatmul.mubr.bf16.gmra.mrb[0].mxu0 %v1555
      %v1735 = vpop.f32.mrb[0].mxu0
      %v1736 = vadd.f32 0.0, %v1735
      %v1737 = vpop.f32.mrb[0].mxu0
      %v1738 = vpop.f32.mrb[0].mxu0
      %v1739 = vadd.f32 0.0, %v1738
      %v1740 = vpop.f32.mrb[0].mxu0
      %1741 = vmatprep.mubr.bf16.mxu0 %v1558
      %1742 = vmatmul.mubr.bf16.gmra.mrb[0].mxu0 %v1557
      %v1743 = vpop.f32.mrb[0].mxu0
      %v1744 = vadd.f32 0.0, %v1743
      %v1745 = vpop.f32.mrb[0].mxu0
      %v1746 = vpop.f32.mrb[0].mxu0
      %v1747 = vadd.f32 0.0, %v1746
      %v1748 = vpop.f32.mrb[0].mxu0
      %1749 = vmatprep.mubr.bf16.mxu0 %v1560
      %1750 = vmatmul.mubr.bf16.gmra.mrb[0].mxu0 %v1559
      %v1751 = vpop.f32.mrb[0].mxu0
      %v1752 = vadd.f32 0.0, %v1751
      %v1753 = vpop.f32.mrb[0].mxu0
      %v1754 = vpop.f32.mrb[0].mxu0
      %v1755 = vadd.f32 0.0, %v1754
      %v1756 = vpop.f32.mrb[0].mxu0
      %1757 = vmatprep.mubr.bf16.mxu0 %v1562
      %1758 = vmatmul.mubr.bf16.gmra.mrb[0].mxu0 %v1561
      %v1759 = vpop.f32.mrb[0].mxu0
      %v1760 = vadd.f32 0.0, %v1759
      %v1761 = vpop.f32.mrb[0].mxu0
      %v1762 = vpop.f32.mrb[0].mxu0
      %v1763 = vadd.f32 0.0, %v1762
      %v1764 = vpop.f32.mrb[0].mxu0
      %1765 = vmatprep.mubr.bf16.mxu0 %v1564
      %1766 = vmatmul.mubr.bf16.gmra.mrb[0].mxu0 %v1563
      %v1767 = vpop.f32.mrb[0].mxu0
      %v1768 = vadd.f32 0.0, %v1767
      %v1769 = vpop.f32.mrb[0].mxu0
      %v1770 = vpop.f32.mrb[0].mxu0
      %v1771 = vadd.f32 0.0, %v1770
      %v1772 = vpop.f32.mrb[0].mxu0
      %1773 = vmatprep.mubr.bf16.mxu0 %v1566
      %1774 = vmatmul.mubr.bf16.gmra.mrb[0].mxu0 %v1565
      %v1775 = vpop.f32.mrb[0].mxu0
      %v1776 = vadd.f32 0.0, %v1775
      %v1777 = vpop.f32.mrb[0].mxu0
      %v1778 = vpop.f32.mrb[0].mxu0
      %v1779 = vadd.f32 0.0, %v1778
      %v1780 = vpop.f32.mrb[0].mxu0
      %1781 = vmatprep.mubr.bf16.mxu0 %v1568
      %1782 = vmatmul.mubr.bf16.gmra.mrb[0].mxu0 %v1567
      %v1783 = vpop.f32.mrb[0].mxu0
      %v1784 = vadd.f32 0.0, %v1783
      %v1785 = vpop.f32.mrb[0].mxu0
      %v1786 = vpop.f32.mrb[0].mxu0
      %v1787 = vadd.f32 0.0, %v1786
      %v1788 = vpop.f32.mrb[0].mxu0
      %1789 = vmatprep.mubr.bf16.mxu0 %v1570
      %1790 = vmatmul.mubr.bf16.gmra.mrb[0].mxu0 %v1569
      %v1791 = vpop.f32.mrb[0].mxu0
      %v1792 = vadd.f32 0.0, %v1791
      %v1793 = vpop.f32.mrb[0].mxu0
      %v1794 = vpop.f32.mrb[0].mxu0
      %v1795 = vadd.f32 0.0, %v1794
      %v1796 = vpop.f32.mrb[0].mxu0
      %1797 = vmatprep.mubr.bf16.mxu0 %v1572
      %1798 = vmatmul.mubr.bf16.gmra.mrb[0].mxu0 %v1571
      %v1799 = vpop.f32.mrb[0].mxu0
      %v1800 = vadd.f32 0.0, %v1799
      %v1801 = vpop.f32.mrb[0].mxu0
      %v1802 = vpop.f32.mrb[0].mxu0
      %v1803 = vadd.f32 0.0, %v1802
      %v1804 = vpop.f32.mrb[0].mxu0
      %1805 = vmatprep.mubr.bf16.mxu0 %v1574
      %1806 = vmatmul.mubr.bf16.gmra.mrb[0].mxu0 %v1573
      %v1807 = vpop.f32.mrb[0].mxu0
      %v1808 = vadd.f32 0.0, %v1807
      %v1809 = vpop.f32.mrb[0].mxu0
      %v1810 = vpop.f32.mrb[0].mxu0
      %v1811 = vadd.f32 0.0, %v1810
      %v1812 = vpop.f32.mrb[0].mxu0
      %1813 = vmatprep.mubr.bf16.mxu0 %v1576
      %1814 = vmatmul.mubr.bf16.gmra.mrb[0].mxu0 %v1575
      %v1815 = vpop.f32.mrb[0].mxu0
      %v1816 = vadd.f32 0.0, %v1815
      %v1817 = vpop.f32.mrb[0].mxu0
      %v1818 = vpop.f32.mrb[0].mxu0
      %v1819 = vadd.f32 0.0, %v1818
      %v1820 = vpop.f32.mrb[0].mxu0
      %1821 = vmatprep.mubr.bf16.mxu0 %v1578
      %1822 = vmatmul.mubr.bf16.gmra.mrb[0].mxu0 %v1577
      %v1823 = vpop.f32.mrb[0].mxu0
      %v1824 = vadd.f32 0.0, %v1823
      %v1825 = vpop.f32.mrb[0].mxu0
      %v1826 = vpop.f32.mrb[0].mxu0
      %v1827 = vadd.f32 0.0, %v1826
      %v1828 = vpop.f32.mrb[0].mxu0
      %1829 = vmatprep.mubr.bf16.mxu0 %v1580
      %1830 = vmatmul.mubr.bf16.gmra.mrb[0].mxu0 %v1579
      %v1831 = vpop.f32.mrb[0].mxu0
      %v1832 = vadd.f32 0.0, %v1831
      %v1833 = vpop.f32.mrb[0].mxu0
      %v1834 = vpop.f32.mrb[0].mxu0
      %v1835 = vadd.f32 0.0, %v1834
      %v1836 = vpop.f32.mrb[0].mxu0
      %1837 = vmatprep.mubr.bf16.mxu0 %v1582
      %1838 = vmatmul.mubr.bf16.gmra.mrb[0].mxu0 %v1581
      %v1839 = vpop.f32.mrb[0].mxu0
      %v1840 = vadd.f32 0.0, %v1839
      %v1841 = vpop.f32.mrb[0].mxu0
      %v1842 = vpop.f32.mrb[0].mxu0
      %v1843 = vpop.f32.mrb[0].mxu0
      %1844 = vdwg.mxu0
      %1845 = vrot.lane.b32.xlu0 %v1201, 127
      %v1846 = vpop.permute.xlu0 %1845
      %1847 = vrot.lane.b32.xlu0 %v1203, 127
      %v1848 = vpop.permute.xlu0 %1847
      %1849 = vrot.lane.b32.xlu0 %v1319, 127
      %v1850 = vpop.permute.xlu0 %1849
      %v1851 = vlaneseq
      %v1852 = vand.u32 %v1851, 127
      %vm1853 = vcmp.lt.s32.totalorder %v1852, 127
      %v1854 = vsel %vm1853, %v1848, %v1850
      %v1855 = vsel %vm1853, %v1846, %v1848
      %v1856 = vsel %vm1853, %v1850, %v1846
      %v1857 = vadd.f32 %v1195, %v1855
      %v1858 = vadd.f32 %v1197, %v1854
      %v1859 = vadd.f32 %v1314, %v1856
      %1860 = vrot.lane.b32.xlu0 %v1207, 126
      %v1861 = vpop.permute.xlu0 %1860
      %1862 = vrot.lane.b32.xlu0 %v1209, 126
      %v1863 = vpop.permute.xlu0 %1862
      %1864 = vrot.lane.b32.xlu0 %v1324, 126
      %v1865 = vpop.permute.xlu0 %1864
      %vm1866 = vcmp.lt.s32.totalorder %v1852, 126
      %v1867 = vsel %vm1866, %v1863, %v1865
      %v1868 = vsel %vm1866, %v1861, %v1863
      %v1869 = vsel %vm1866, %v1865, %v1861
      %v1870 = vadd.f32 %v1857, %v1868
      %v1871 = vadd.f32 %v1858, %v1867
      %v1872 = vadd.f32 %v1859, %v1869
      %1873 = vrot.lane.b32.xlu0 %v1213, 110
      %v1874 = vpop.permute.xlu0 %1873
      %1875 = vrot.lane.b32.xlu0 %v1215, 110
      %v1876 = vpop.permute.xlu0 %1875
      %1877 = vrot.lane.b32.xlu0 %v1329, 110
      %v1878 = vpop.permute.xlu0 %1877
      %vm1879 = vcmp.lt.s32.totalorder %v1852, 110
      %v1880 = vsel %vm1879, %v1876, %v1878
      %v1881 = vsel %vm1879, %v1874, %v1876
      %v1882 = vsel %vm1879, %v1878, %v1874
      %v1883 = vadd.f32 %v1870, %v1881
      %v1884 = vadd.f32 %v1871, %v1880
      %v1885 = vadd.f32 %v1872, %v1882
      %1886 = vrot.lane.b32.xlu0 %v1219, 109
      %v1887 = vpop.permute.xlu0 %1886
      %1888 = vrot.lane.b32.xlu0 %v1221, 109
      %v1889 = vpop.permute.xlu0 %1888
      %1890 = vrot.lane.b32.xlu0 %v1334, 109
      %v1891 = vpop.permute.xlu0 %1890
      %vm1892 = vcmp.lt.s32.totalorder %v1852, 109
      %v1893 = vsel %vm1892, %v1889, %v1891
      %v1894 = vsel %vm1892, %v1887, %v1889
      %v1895 = vsel %vm1892, %v1891, %v1887
      %v1896 = vadd.f32 %v1883, %v1894
      %v1897 = vadd.f32 %v1884, %v1893
      %v1898 = vadd.f32 %v1885, %v1895
      %1899 = vrot.lane.b32.xlu0 %v1225, 108
      %v1900 = vpop.permute.xlu0 %1899
      %1901 = vrot.lane.b32.xlu0 %v1227, 108
      %v1902 = vpop.permute.xlu0 %1901
      %1903 = vrot.lane.b32.xlu0 %v1339, 108
      %v1904 = vpop.permute.xlu0 %1903
      %vm1905 = vcmp.lt.s32.totalorder %v1852, 108
      %v1906 = vsel %vm1905, %v1902, %v1904
      %v1907 = vsel %vm1905, %v1900, %v1902
      %v1908 = vsel %vm1905, %v1904, %v1900
      %v1909 = vadd.f32 %v1896, %v1907
      %v1910 = vadd.f32 %v1897, %v1906
      %v1911 = vadd.f32 %v1898, %v1908
      %1912 = vrot.lane.b32.xlu0 %v1231, 92
      %v1913 = vpop.permute.xlu0 %1912
      %1914 = vrot.lane.b32.xlu0 %v1233, 92
      %v1915 = vpop.permute.xlu0 %1914
      %1916 = vrot.lane.b32.xlu0 %v1344, 92
      %v1917 = vpop.permute.xlu0 %1916
      %vm1918 = vcmp.lt.s32.totalorder %v1852, 92
      %v1919 = vsel %vm1918, %v1915, %v1917
      %v1920 = vsel %vm1918, %v1913, %v1915
      %v1921 = vsel %vm1918, %v1917, %v1913
      %v1922 = vadd.f32 %v1909, %v1920
      %v1923 = vadd.f32 %v1910, %v1919
      %v1924 = vadd.f32 %v1911, %v1921
      %1925 = vrot.lane.b32.xlu0 %v1237, 91
      %v1926 = vpop.permute.xlu0 %1925
      %1927 = vrot.lane.b32.xlu0 %v1239, 91
      %v1928 = vpop.permute.xlu0 %1927
      %1929 = vrot.lane.b32.xlu0 %v1349, 91
      %v1930 = vpop.permute.xlu0 %1929
      %vm1931 = vcmp.lt.s32.totalorder %v1852, 91
      %v1932 = vsel %vm1931, %v1928, %v1930
      %v1933 = vsel %vm1931, %v1926, %v1928
      %v1934 = vsel %vm1931, %v1930, %v1926
      %v1935 = vadd.f32 %v1922, %v1933
      %v1936 = vadd.f32 %v1923, %v1932
      %v1937 = vadd.f32 %v1924, %v1934
      %1938 = vrot.lane.b32.xlu0 %v1243, 90
      %v1939 = vpop.permute.xlu0 %1938
      %1940 = vrot.lane.b32.xlu0 %v1245, 90
      %v1941 = vpop.permute.xlu0 %1940
      %1942 = vrot.lane.b32.xlu0 %v1354, 90
      %v1943 = vpop.permute.xlu0 %1942
      %vm1944 = vcmp.lt.s32.totalorder %v1852, 90
      %v1945 = vsel %vm1944, %v1941, %v1943
      %v1946 = vsel %vm1944, %v1939, %v1941
      %v1947 = vsel %vm1944, %v1943, %v1939
      %v1948 = vadd.f32 %v1935, %v1946
      %v1949 = vadd.f32 %v1936, %v1945
      %v1950 = vadd.f32 %v1937, %v1947
      %1951 = vrot.lane.b32.xlu0 %v1683, 127
      %v1952 = vpop.permute.xlu0 %1951
      %1953 = vrot.lane.b32.xlu0 %v1688, 127
      %v1954 = vpop.permute.xlu0 %1953
      %1955 = vrot.lane.b32.xlu0 %v1691, 127
      %v1956 = vpop.permute.xlu0 %1955
      %1957 = vrot.lane.b32.xlu0 %v1696, 127
      %v1958 = vpop.permute.xlu0 %1957
      %1959 = vrot.lane.b32.xlu0 %v1699, 127
      %v1960 = vpop.permute.xlu0 %1959
      %v1961 = vadd.f32 %v1664, %v1952
      %v1962 = vadd.f32 %v1667, %v1954
      %v1963 = vadd.f32 %v1672, %v1956
      %v1964 = vadd.f32 %v1675, %v1958
      %v1965 = vadd.f32 %v1680, %v1960
      %1966 = vrot.lane.b32.xlu0 %v1704, 126
      %v1967 = vpop.permute.xlu0 %1966
      %1968 = vrot.lane.b32.xlu0 %v1707, 126
      %v1969 = vpop.permute.xlu0 %1968
      %1970 = vrot.lane.b32.xlu0 %v1712, 126
      %v1971 = vpop.permute.xlu0 %1970
      %1972 = vrot.lane.b32.xlu0 %v1715, 126
      %v1973 = vpop.permute.xlu0 %1972
      %1974 = vrot.lane.b32.xlu0 %v1720, 126
      %v1975 = vpop.permute.xlu0 %1974
      %v1976 = vadd.f32 %v1961, %v1967
      %v1977 = vadd.f32 %v1962, %v1969
      %v1978 = vadd.f32 %v1963, %v1971
      %v1979 = vadd.f32 %v1964, %v1973
      %v1980 = vadd.f32 %v1965, %v1975
      %1981 = vrot.lane.b32.xlu0 %v1723, 118
      %v1982 = vpop.permute.xlu0 %1981
      %1983 = vrot.lane.b32.xlu0 %v1728, 118
      %v1984 = vpop.permute.xlu0 %1983
      %1985 = vrot.lane.b32.xlu0 %v1731, 118
      %v1986 = vpop.permute.xlu0 %1985
      %1987 = vrot.lane.b32.xlu0 %v1736, 118
      %v1988 = vpop.permute.xlu0 %1987
      %1989 = vrot.lane.b32.xlu0 %v1739, 118
      %v1990 = vpop.permute.xlu0 %1989
      %v1991 = vadd.f32 %v1976, %v1982
      %v1992 = vadd.f32 %v1977, %v1984
      %v1993 = vadd.f32 %v1978, %v1986
      %v1994 = vadd.f32 %v1979, %v1988
      %v1995 = vadd.f32 %v1980, %v1990
      %1996 = vrot.lane.b32.xlu0 %v1744, 117
      %v1997 = vpop.permute.xlu0 %1996
      %1998 = vrot.lane.b32.xlu0 %v1747, 117
      %v1999 = vpop.permute.xlu0 %1998
      %2000 = vrot.lane.b32.xlu0 %v1752, 117
      %v2001 = vpop.permute.xlu0 %2000
      %2002 = vrot.lane.b32.xlu0 %v1755, 117
      %v2003 = vpop.permute.xlu0 %2002
      %2004 = vrot.lane.b32.xlu0 %v1760, 117
      %v2005 = vpop.permute.xlu0 %2004
      %v2006 = vadd.f32 %v1991, %v1997
      %v2007 = vadd.f32 %v1992, %v1999
      %v2008 = vadd.f32 %v1993, %v2001
      %v2009 = vadd.f32 %v1994, %v2003
      %v2010 = vadd.f32 %v1995, %v2005
      %2011 = vrot.lane.b32.xlu0 %v1763, 116
      %v2012 = vpop.permute.xlu0 %2011
      %2013 = vrot.lane.b32.xlu0 %v1768, 116
      %v2014 = vpop.permute.xlu0 %2013
      %2015 = vrot.lane.b32.xlu0 %v1771, 116
      %v2016 = vpop.permute.xlu0 %2015
      %2017 = vrot.lane.b32.xlu0 %v1776, 116
      %v2018 = vpop.permute.xlu0 %2017
      %2019 = vrot.lane.b32.xlu0 %v1779, 116
      %v2020 = vpop.permute.xlu0 %2019
      %v2021 = vadd.f32 %v2006, %v2012
      %v2022 = vadd.f32 %v2007, %v2014
      %v2023 = vadd.f32 %v2008, %v2016
      %v2024 = vadd.f32 %v2009, %v2018
      %v2025 = vadd.f32 %v2010, %v2020
      %2026 = vrot.lane.b32.xlu0 %v1784, 108
      %v2027 = vpop.permute.xlu0 %2026
      %2028 = vrot.lane.b32.xlu0 %v1787, 108
      %v2029 = vpop.permute.xlu0 %2028
      %2030 = vrot.lane.b32.xlu0 %v1792, 108
      %v2031 = vpop.permute.xlu0 %2030
      %2032 = vrot.lane.b32.xlu0 %v1795, 108
      %v2033 = vpop.permute.xlu0 %2032
      %2034 = vrot.lane.b32.xlu0 %v1800, 108
      %v2035 = vpop.permute.xlu0 %2034
      %v2036 = vadd.f32 %v2021, %v2027
      %v2037 = vadd.f32 %v2022, %v2029
      %v2038 = vadd.f32 %v2023, %v2031
      %v2039 = vadd.f32 %v2024, %v2033
      %v2040 = vadd.f32 %v2025, %v2035
      %2041 = vrot.lane.b32.xlu0 %v1803, 107
      %v2042 = vpop.permute.xlu0 %2041
      %2043 = vrot.lane.b32.xlu0 %v1808, 107
      %v2044 = vpop.permute.xlu0 %2043
      %2045 = vrot.lane.b32.xlu0 %v1811, 107
      %v2046 = vpop.permute.xlu0 %2045
      %2047 = vrot.lane.b32.xlu0 %v1816, 107
      %v2048 = vpop.permute.xlu0 %2047
      %2049 = vrot.lane.b32.xlu0 %v1819, 107
      %v2050 = vpop.permute.xlu0 %2049
      %v2051 = vadd.f32 %v2036, %v2042
      %v2052 = vadd.f32 %v2037, %v2044
      %v2053 = vadd.f32 %v2038, %v2046
      %v2054 = vadd.f32 %v2039, %v2048
      %v2055 = vadd.f32 %v2040, %v2050
      %2056 = vrot.lane.b32.xlu0 %v1824, 106
      %v2057 = vpop.permute.xlu0 %2056
      %2058 = vrot.lane.b32.xlu0 %v1827, 106
      %v2059 = vpop.permute.xlu0 %2058
      %2060 = vrot.lane.b32.xlu0 %v1832, 106
      %v2061 = vpop.permute.xlu0 %2060
      %2062 = vrot.lane.b32.xlu0 %v1835, 106
      %v2063 = vpop.permute.xlu0 %2062
      %2064 = vrot.lane.b32.xlu0 %v1840, 106
      %v2065 = vpop.permute.xlu0 %2064
      %v2066 = vadd.f32 %v2051, %v2057
      %v2067 = vadd.f32 %v2052, %v2059
      %v2068 = vadd.f32 %v2053, %v2061
      %v2069 = vadd.f32 %v2054, %v2063
      %v2070 = vadd.f32 %v2055, %v2065
      %v2071 = vld [vmem:[%s5] sm:$0xff]
      %v2072 = vld [vmem:[%s5 + $0x8] sm:$0xff]
      %v2073 = vld [vmem:[%s5 + $0x10] sm:$0xff]
      %v2074 = vld [vmem:[%s5 + $0x18] sm:$0xff]
      %v2075 = vld [vmem:[%s5 + $0x20] sm:$0xff]
      %v2076 = vld [vmem:[%s5 + $0x28] sm:$0xff]
      %v2077 = vld [vmem:[%s5 + $0x30] sm:$0xff]
      %v2078 = vld [vmem:[%s5 + $0x38] sm:$0xff]
      %v2079 = vld [vmem:[%s5 + $0x40] sm:$0xff]
      %v2080 = vld [vmem:[%s5 + $0x48] sm:$0xff]
      %v2081 = vld [vmem:[%s5 + $0x50] sm:$0xff]
      %v2082 = vld [vmem:[%s5 + $0x58] sm:$0xff]
      %v2083 = vld [vmem:[%s5 + $0x60] sm:$0xff]
      %v2084 = vld [vmem:[%s5 + $0x68] sm:$0xff]
      %v2085 = vld [vmem:[%s5 + $0x70] sm:$0xff]
      %v2086 = vld [vmem:[%s5 + $0x78] sm:$0xff]
      %v2087 = vld [vmem:[%s5 + $0x80] sm:$0xff]
      %v2088 = vld [vmem:[%s5 + $0x88] sm:$0xff]
      %v2089 = vld [vmem:[%s5 + $0x90] sm:$0xff]
      %v2090 = vld [vmem:[%s5 + $0x98] sm:$0xff]
      %v2091 = vld [vmem:[%s5 + $0xa0] sm:$0xff]
      %v2092 = vld [vmem:[%s5 + $0xa8] sm:$0xff]
      %v2093 = vld [vmem:[%s5 + $0xb0] sm:$0xff]
      %v2094 = vld [vmem:[%s5 + $0xb8] sm:$0xff]
      %v2095 = vld [vmem:[%s5 + $0xc0] sm:$0xff]
      %v2096 = vld [vmem:[%s5 + $0xc8] sm:$0xff]
      %v2097 = vld [vmem:[%s5 + $0xd0] sm:$0xff]
      %v2098 = vld [vmem:[%s5 + $0xd8] sm:$0xff]
      %v2099 = vld [vmem:[%s5 + $0xe0] sm:$0xff]
      %v2100 = vld [vmem:[%s5 + $0xe8] sm:$0xff]
      %v2101 = vld [vmem:[%s5 + $0xf0] sm:$0xff]
      %v2102 = vld [vmem:[%s5 + $0xf8] sm:$0xff]
      %2103 = vmatprep.subr.mxu0 %v2072
      %2104 = vmatpush1.msra.mxu0 %v2071
      %2105 = vmatprep.subr.mxu0 %v2074
      %2106 = vmatpush1.msra.mxu0 %v2073
      %2107 = vmatprep.subr.mxu0 %v2076
      %2108 = vmatpush1.msra.mxu0 %v2075
      %2109 = vmatprep.subr.mxu0 %v2078
      %2110 = vmatpush1.msra.mxu0 %v2077
      %2111 = vmatprep.subr.mxu0 %v2080
      %2112 = vmatpush1.msra.mxu0 %v2079
      %2113 = vmatprep.subr.mxu0 %v2082
      %2114 = vmatpush1.msra.mxu0 %v2081
      %2115 = vmatprep.subr.mxu0 %v2084
      %2116 = vmatpush1.msra.mxu0 %v2083
      %2117 = vmatprep.subr.mxu0 %v2086
      %2118 = vmatpush1.msra.mxu0 %v2085
      %2119 = vmatprep.subr.mxu0 %v2088
      %2120 = vmatpush1.msra.mxu0 %v2087
      %2121 = vmatprep.subr.mxu0 %v2090
      %2122 = vmatpush1.msra.mxu0 %v2089
      %2123 = vmatprep.subr.mxu0 %v2092
      %2124 = vmatpush1.msra.mxu0 %v2091
      %2125 = vmatprep.subr.mxu0 %v2094
      %2126 = vmatpush1.msra.mxu0 %v2093
      %2127 = vmatprep.subr.mxu0 %v2096
      %2128 = vmatpush1.msra.mxu0 %v2095
      %2129 = vmatprep.subr.mxu0 %v2098
      %2130 = vmatpush1.msra.mxu0 %v2097
      %2131 = vmatprep.subr.mxu0 %v2100
      %2132 = vmatpush1.msra.mxu0 %v2099
      %2133 = vmatprep.subr.mxu0 %v2102
      %2134 = vmatpush1.msra.mxu0 %v2101
      %2135 = vmatprep.subr.mxu0 0.0
      %2136 = vmatpush1.msra.mxu0 0.0
      %2137 = vmatprep.subr.mxu0 0.0
      %2138 = vmatpush1.msra.mxu0 0.0
      %2139 = vmatprep.subr.mxu0 0.0
      %2140 = vmatpush1.msra.mxu0 0.0
      %2141 = vmatprep.subr.mxu0 0.0
      %2142 = vmatpush1.msra.mxu0 0.0
      %2143 = vmatprep.subr.mxu0 0.0
      %2144 = vmatpush1.msra.mxu0 0.0
      %2145 = vmatprep.subr.mxu0 0.0
      %2146 = vmatpush1.msra.mxu0 0.0
      %2147 = vmatprep.subr.mxu0 0.0
      %2148 = vmatpush1.msra.mxu0 0.0
      %2149 = vmatprep.subr.mxu0 0.0
      %2150 = vmatpush1.msra.mxu0 0.0
      %2151 = vmatprep.subr.mxu0 0.0
      %2152 = vmatpush1.msra.mxu0 0.0
      %2153 = vmatprep.subr.mxu0 0.0
      %2154 = vmatpush1.msra.mxu0 0.0
      %2155 = vmatprep.subr.mxu0 0.0
      %2156 = vmatpush1.msra.mxu0 0.0
      %2157 = vmatprep.subr.mxu0 0.0
      %2158 = vmatpush1.msra.mxu0 0.0
      %2159 = vmatprep.subr.mxu0 0.0
      %2160 = vmatpush1.msra.mxu0 0.0
      %2161 = vmatprep.subr.mxu0 0.0
      %2162 = vmatpush1.msra.mxu0 0.0
      %2163 = vmatprep.subr.mxu0 0.0
      %2164 = vmatpush1.msra.mxu0 0.0
      %2165 = vmatprep.subr.mxu0 0.0
      %2166 = vmatpush1.msra.mxu0 0.0
      %2167 = vmatprep.mubr.f32.mxu0 0.0
      %2168 = vmatmul.mubr.f32.gmra.mrb[0].mxu0 %v2066
      %v2169 = vpop.f32.mrb[0].mxu0
      %v2170 = vadd.f32 0.0, %v2169
      %v2171 = vpop.f32.mrb[0].mxu0
      %v2172 = vadd.f32 0.0, %v2171
      %2173 = vdwg.mxu0
      %v2174 = vld [vmem:[%s6] sm:$0xff]
      %v2175 = vld [vmem:[%s6 + $0x8] sm:$0xff]
      %v2176 = vld [vmem:[%s6 + $0x10] sm:$0xff]
      %v2177 = vld [vmem:[%s6 + $0x18] sm:$0xff]
      %v2178 = vld [vmem:[%s6 + $0x20] sm:$0xff]
      %v2179 = vld [vmem:[%s6 + $0x28] sm:$0xff]
      %v2180 = vld [vmem:[%s6 + $0x30] sm:$0xff]
      %v2181 = vld [vmem:[%s6 + $0x38] sm:$0xff]
      %v2182 = vld [vmem:[%s6 + $0x40] sm:$0xff]
      %v2183 = vld [vmem:[%s6 + $0x48] sm:$0xff]
      %v2184 = vld [vmem:[%s6 + $0x50] sm:$0xff]
      %v2185 = vld [vmem:[%s6 + $0x58] sm:$0xff]
      %v2186 = vld [vmem:[%s6 + $0x60] sm:$0xff]
      %v2187 = vld [vmem:[%s6 + $0x68] sm:$0xff]
      %v2188 = vld [vmem:[%s6 + $0x70] sm:$0xff]
      %v2189 = vld [vmem:[%s6 + $0x78] sm:$0xff]
      %v2190 = vld [vmem:[%s6 + $0x80] sm:$0xff]
      %v2191 = vld [vmem:[%s6 + $0x88] sm:$0xff]
      %v2192 = vld [vmem:[%s6 + $0x90] sm:$0xff]
      %v2193 = vld [vmem:[%s6 + $0x98] sm:$0xff]
      %v2194 = vld [vmem:[%s6 + $0xa0] sm:$0xff]
      %v2195 = vld [vmem:[%s6 + $0xa8] sm:$0xff]
      %v2196 = vld [vmem:[%s6 + $0xb0] sm:$0xff]
      %v2197 = vld [vmem:[%s6 + $0xb8] sm:$0xff]
      %v2198 = vld [vmem:[%s6 + $0xc0] sm:$0xff]
      %v2199 = vld [vmem:[%s6 + $0xc8] sm:$0xff]
      %v2200 = vld [vmem:[%s6 + $0xd0] sm:$0xff]
      %v2201 = vld [vmem:[%s6 + $0xd8] sm:$0xff]
      %v2202 = vld [vmem:[%s6 + $0xe0] sm:$0xff]
      %v2203 = vld [vmem:[%s6 + $0xe8] sm:$0xff]
      %v2204 = vld [vmem:[%s6 + $0xf0] sm:$0xff]
      %v2205 = vld [vmem:[%s6 + $0xf8] sm:$0xff]
      %v2206 = vld [vmem:[%s6 + $0x100] sm:$0xff]
      %v2207 = vld [vmem:[%s6 + $0x108] sm:$0xff]
      %v2208 = vld [vmem:[%s6 + $0x110] sm:$0xff]
      %v2209 = vld [vmem:[%s6 + $0x118] sm:$0xff]
      %v2210 = vld [vmem:[%s6 + $0x120] sm:$0xff]
      %v2211 = vld [vmem:[%s6 + $0x128] sm:$0xff]
      %v2212 = vld [vmem:[%s6 + $0x130] sm:$0xff]
      %v2213 = vld [vmem:[%s6 + $0x138] sm:$0xff]
      %v2214 = vld [vmem:[%s6 + $0x140] sm:$0xff]
      %v2215 = vld [vmem:[%s6 + $0x148] sm:$0xff]
      %v2216 = vld [vmem:[%s6 + $0x150] sm:$0xff]
      %v2217 = vld [vmem:[%s6 + $0x158] sm:$0xff]
      %v2218 = vld [vmem:[%s6 + $0x160] sm:$0xff]
      %v2219 = vld [vmem:[%s6 + $0x168] sm:$0xff]
      %v2220 = vld [vmem:[%s6 + $0x170] sm:$0xff]
      %v2221 = vld [vmem:[%s6 + $0x178] sm:$0xff]
      %v2222 = vld [vmem:[%s6 + $0x180] sm:$0xff]
      %v2223 = vld [vmem:[%s6 + $0x188] sm:$0xff]
      %v2224 = vld [vmem:[%s6 + $0x190] sm:$0xff]
      %v2225 = vld [vmem:[%s6 + $0x198] sm:$0xff]
      %v2226 = vld [vmem:[%s6 + $0x1a0] sm:$0xff]
      %v2227 = vld [vmem:[%s6 + $0x1a8] sm:$0xff]
      %v2228 = vld [vmem:[%s6 + $0x1b0] sm:$0xff]
      %v2229 = vld [vmem:[%s6 + $0x1b8] sm:$0xff]
      %v2230 = vld [vmem:[%s6 + $0x1c0] sm:$0xff]
      %v2231 = vld [vmem:[%s6 + $0x1c8] sm:$0xff]
      %v2232 = vld [vmem:[%s6 + $0x1d0] sm:$0xff]
      %v2233 = vld [vmem:[%s6 + $0x1d8] sm:$0xff]
      %v2234 = vld [vmem:[%s6 + $0x1e0] sm:$0xff]
      %v2235 = vld [vmem:[%s6 + $0x1e8] sm:$0xff]
      %v2236 = vld [vmem:[%s6 + $0x1f0] sm:$0xff]
      %v2237 = vld [vmem:[%s6 + $0x1f8] sm:$0xff]
      %v2238 = vld [vmem:[%s6 + $0x200] sm:$0xff]
      %v2239 = vld [vmem:[%s6 + $0x208] sm:$0xff]
      %v2240 = vld [vmem:[%s6 + $0x210] sm:$0xff]
      %v2241 = vld [vmem:[%s6 + $0x218] sm:$0xff]
      %v2242 = vld [vmem:[%s6 + $0x220] sm:$0xff]
      %v2243 = vld [vmem:[%s6 + $0x228] sm:$0xff]
      %v2244 = vld [vmem:[%s6 + $0x230] sm:$0xff]
      %v2245 = vld [vmem:[%s6 + $0x238] sm:$0xff]
      %v2246 = vld [vmem:[%s6 + $0x240] sm:$0xff]
      %v2247 = vld [vmem:[%s6 + $0x248] sm:$0xff]
      %v2248 = vld [vmem:[%s6 + $0x250] sm:$0xff]
      %v2249 = vld [vmem:[%s6 + $0x258] sm:$0xff]
      %v2250 = vld [vmem:[%s6 + $0x260] sm:$0xff]
      %v2251 = vld [vmem:[%s6 + $0x268] sm:$0xff]
      %v2252 = vld [vmem:[%s6 + $0x270] sm:$0xff]
      %v2253 = vld [vmem:[%s6 + $0x278] sm:$0xff]
      %v2254 = vld [vmem:[%s6 + $0x280] sm:$0xff]
      %v2255 = vld [vmem:[%s6 + $0x288] sm:$0xff]
      %v2256 = vld [vmem:[%s6 + $0x290] sm:$0xff]
      %v2257 = vld [vmem:[%s6 + $0x298] sm:$0xff]
      %v2258 = vld [vmem:[%s6 + $0x2a0] sm:$0xff]
      %v2259 = vld [vmem:[%s6 + $0x2a8] sm:$0xff]
      %v2260 = vld [vmem:[%s6 + $0x2b0] sm:$0xff]
      %v2261 = vld [vmem:[%s6 + $0x2b8] sm:$0xff]
      %v2262 = vld [vmem:[%s6 + $0x2c0] sm:$0xff]
      %v2263 = vld [vmem:[%s6 + $0x2c8] sm:$0xff]
      %v2264 = vld [vmem:[%s6 + $0x2d0] sm:$0xff]
      %v2265 = vld [vmem:[%s6 + $0x2d8] sm:$0xff]
      %v2266 = vld [vmem:[%s6 + $0x2e0] sm:$0xff]
      %v2267 = vld [vmem:[%s6 + $0x2e8] sm:$0xff]
      %v2268 = vld [vmem:[%s6 + $0x2f0] sm:$0xff]
      %v2269 = vld [vmem:[%s6 + $0x2f8] sm:$0xff]
      %2270 = vmatprep.subr.mxu0 %v2175
      %2271 = vmatpush1.msra.mxu0 %v2174
      %2272 = vmatprep.subr.mxu0 %v2177
      %2273 = vmatpush1.msra.mxu0 %v2176
      %2274 = vmatprep.subr.mxu0 %v2179
      %2275 = vmatpush1.msra.mxu0 %v2178
      %2276 = vmatprep.subr.mxu0 %v2181
      %2277 = vmatpush1.msra.mxu0 %v2180
      %2278 = vmatprep.subr.mxu0 %v2183
      %2279 = vmatpush1.msra.mxu0 %v2182
      %2280 = vmatprep.subr.mxu0 %v2185
      %2281 = vmatpush1.msra.mxu0 %v2184
      %2282 = vmatprep.subr.mxu0 %v2187
      %2283 = vmatpush1.msra.mxu0 %v2186
      %2284 = vmatprep.subr.mxu0 %v2189
      %2285 = vmatpush1.msra.mxu0 %v2188
      %2286 = vmatprep.subr.mxu0 %v2191
      %2287 = vmatpush1.msra.mxu0 %v2190
      %2288 = vmatprep.subr.mxu0 %v2193
      %2289 = vmatpush1.msra.mxu0 %v2192
      %2290 = vmatprep.subr.mxu0 %v2195
      %2291 = vmatpush1.msra.mxu0 %v2194
      %2292 = vmatprep.subr.mxu0 %v2197
      %2293 = vmatpush1.msra.mxu0 %v2196
      %2294 = vmatprep.subr.mxu0 %v2199
      %2295 = vmatpush1.msra.mxu0 %v2198
      %2296 = vmatprep.subr.mxu0 %v2201
      %2297 = vmatpush1.msra.mxu0 %v2200
      %2298 = vmatprep.subr.mxu0 %v2203
      %2299 = vmatpush1.msra.mxu0 %v2202
      %2300 = vmatprep.subr.mxu0 %v2205
      %2301 = vmatpush1.msra.mxu0 %v2204
      %2302 = vmatprep.subr.mxu0 %v2207
      %2303 = vmatpush1.msra.mxu0 %v2206
      %2304 = vmatprep.subr.mxu0 %v2209
      %2305 = vmatpush1.msra.mxu0 %v2208
      %2306 = vmatprep.subr.mxu0 %v2211
      %2307 = vmatpush1.msra.mxu0 %v2210
      %2308 = vmatprep.subr.mxu0 %v2213
      %2309 = vmatpush1.msra.mxu0 %v2212
      %2310 = vmatprep.subr.mxu0 %v2215
      %2311 = vmatpush1.msra.mxu0 %v2214
      %2312 = vmatprep.subr.mxu0 %v2217
      %2313 = vmatpush1.msra.mxu0 %v2216
      %2314 = vmatprep.subr.mxu0 %v2219
      %2315 = vmatpush1.msra.mxu0 %v2218
      %2316 = vmatprep.subr.mxu0 %v2221
      %2317 = vmatpush1.msra.mxu0 %v2220
      %2318 = vmatprep.subr.mxu0 %v2223
      %2319 = vmatpush1.msra.mxu0 %v2222
      %2320 = vmatprep.subr.mxu0 %v2225
      %2321 = vmatpush1.msra.mxu0 %v2224
      %2322 = vmatprep.subr.mxu0 %v2227
      %2323 = vmatpush1.msra.mxu0 %v2226
      %2324 = vmatprep.subr.mxu0 %v2229
      %2325 = vmatpush1.msra.mxu0 %v2228
      %2326 = vmatprep.subr.mxu0 %v2231
      %2327 = vmatpush1.msra.mxu0 %v2230
      %2328 = vmatprep.subr.mxu0 %v2233
      %2329 = vmatpush1.msra.mxu0 %v2232
      %2330 = vmatprep.subr.mxu0 %v2235
      %2331 = vmatpush1.msra.mxu0 %v2234
      %2332 = vmatprep.subr.mxu0 %v2237
      %2333 = vmatpush1.msra.mxu0 %v2236
      %2334 = vmatprep.mubr.f32.mxu0 %v1949
      %2335 = vmatmul.mubr.f32.gmra.mrb[0].mxu0 %v1948
      %v2336 = vpop.f32.mrb[0].mxu0
      %v2337 = vadd.f32 %v2170, %v2336
      %v2338 = vpop.f32.mrb[0].mxu0
      %v2339 = vadd.f32 %v2172, %v2338
      %2340 = vdwg.mxu0
      %2341 = vmatprep.subr.mxu0 %v2239
      %2342 = vmatpush1.msra.mxu0 %v2238
      %2343 = vmatprep.subr.mxu0 %v2241
      %2344 = vmatpush1.msra.mxu0 %v2240
      %2345 = vmatprep.subr.mxu0 %v2243
      %2346 = vmatpush1.msra.mxu0 %v2242
      %2347 = vmatprep.subr.mxu0 %v2245
      %2348 = vmatpush1.msra.mxu0 %v2244
      %2349 = vmatprep.subr.mxu0 %v2247
      %2350 = vmatpush1.msra.mxu0 %v2246
      %2351 = vmatprep.subr.mxu0 %v2249
      %2352 = vmatpush1.msra.mxu0 %v2248
      %2353 = vmatprep.subr.mxu0 %v2251
      %2354 = vmatpush1.msra.mxu0 %v2250
      %2355 = vmatprep.subr.mxu0 %v2253
      %2356 = vmatpush1.msra.mxu0 %v2252
      %2357 = vmatprep.subr.mxu0 %v2255
      %2358 = vmatpush1.msra.mxu0 %v2254
      %2359 = vmatprep.subr.mxu0 %v2257
      %2360 = vmatpush1.msra.mxu0 %v2256
      %2361 = vmatprep.subr.mxu0 %v2259
      %2362 = vmatpush1.msra.mxu0 %v2258
      %2363 = vmatprep.subr.mxu0 %v2261
      %2364 = vmatpush1.msra.mxu0 %v2260
      %2365 = vmatprep.subr.mxu0 %v2263
      %2366 = vmatpush1.msra.mxu0 %v2262
      %2367 = vmatprep.subr.mxu0 %v2265
      %2368 = vmatpush1.msra.mxu0 %v2264
      %2369 = vmatprep.subr.mxu0 %v2267
      %2370 = vmatpush1.msra.mxu0 %v2266
      %2371 = vmatprep.subr.mxu0 %v2269
      %2372 = vmatpush1.msra.mxu0 %v2268
      %2373 = vmatprep.subr.mxu0 0.0
      %2374 = vmatpush1.msra.mxu0 0.0
      %2375 = vmatprep.subr.mxu0 0.0
      %2376 = vmatpush1.msra.mxu0 0.0
      %2377 = vmatprep.subr.mxu0 0.0
      %2378 = vmatpush1.msra.mxu0 0.0
      %2379 = vmatprep.subr.mxu0 0.0
      %2380 = vmatpush1.msra.mxu0 0.0
      %2381 = vmatprep.subr.mxu0 0.0
      %2382 = vmatpush1.msra.mxu0 0.0
      %2383 = vmatprep.subr.mxu0 0.0
      %2384 = vmatpush1.msra.mxu0 0.0
      %2385 = vmatprep.subr.mxu0 0.0
      %2386 = vmatpush1.msra.mxu0 0.0
      %2387 = vmatprep.subr.mxu0 0.0
      %2388 = vmatpush1.msra.mxu0 0.0
      %2389 = vmatprep.subr.mxu0 0.0
      %2390 = vmatpush1.msra.mxu0 0.0
      %2391 = vmatprep.subr.mxu0 0.0
      %2392 = vmatpush1.msra.mxu0 0.0
      %2393 = vmatprep.subr.mxu0 0.0
      %2394 = vmatpush1.msra.mxu0 0.0
      %2395 = vmatprep.subr.mxu0 0.0
      %2396 = vmatpush1.msra.mxu0 0.0
      %2397 = vmatprep.subr.mxu0 0.0
      %2398 = vmatpush1.msra.mxu0 0.0
      %2399 = vmatprep.subr.mxu0 0.0
      %2400 = vmatpush1.msra.mxu0 0.0
      %2401 = vmatprep.subr.mxu0 0.0
      %2402 = vmatpush1.msra.mxu0 0.0
      %2403 = vmatprep.subr.mxu0 0.0
      %2404 = vmatpush1.msra.mxu0 0.0
      %2405 = vmatprep.mubr.f32.mxu0 0.0
      %2406 = vmatmul.mubr.f32.gmra.mrb[0].mxu0 %v1950
      %v2407 = vpop.f32.mrb[0].mxu0
      %v2408 = vadd.f32 %v2337, %v2407
      %v2409 = vpop.f32.mrb[0].mxu0
      %v2410 = vadd.f32 %v2339, %v2409
      %2411 = vdwg.mxu0
      %v2412 = vld [vmem:[%s8] sm:$0xf]
      %2414 = vset.pattern.permute.xlu0 0
      %2415 = vperm.xlu0 %2414, %v2412
      %v2416 = vpop.permute.xlu0 %2415
      %v2418 = vadd.f32 %v2408, %v2416
      %v2419 = vadd.f32 %v2410, %v2416
      %v2422 = vcombine.low %v2418, %v2419
      %2424 = vst [vmem:[%s399] sm:$0xff] %v2422
      %v2425 = vadd.f32 %v2067, %v2069
      %v2426 = vadd.f32 %v2068, %v2070
      %v2427 = vld [vmem:[%s7] sm:$0xff]
      %v2428 = vld [vmem:[%s7 + $0x8] sm:$0xff]
      %v2429 = vld [vmem:[%s7 + $0x10] sm:$0xff]
      %v2430 = vld [vmem:[%s7 + $0x18] sm:$0xff]
      %v2431 = vld [vmem:[%s7 + $0x20] sm:$0xff]
      %v2432 = vld [vmem:[%s7 + $0x28] sm:$0xff]
      %v2433 = vld [vmem:[%s7 + $0x30] sm:$0xff]
      %v2434 = vld [vmem:[%s7 + $0x38] sm:$0xff]
      %v2435 = vld [vmem:[%s7 + $0x40] sm:$0xff]
      %v2436 = vld [vmem:[%s7 + $0x48] sm:$0xff]
      %v2437 = vld [vmem:[%s7 + $0x50] sm:$0xff]
      %v2438 = vld [vmem:[%s7 + $0x58] sm:$0xff]
      %v2439 = vld [vmem:[%s7 + $0x60] sm:$0xff]
      %v2440 = vld [vmem:[%s7 + $0x68] sm:$0xff]
      %v2441 = vld [vmem:[%s7 + $0x70] sm:$0xff]
      %v2442 = vld [vmem:[%s7 + $0x78] sm:$0xff]
      %2443 = vmatprep.subr.mxu0 0.0
      %2444 = vmatpush1.msra.mxu0 %v2427
      %2445 = vmatprep.subr.mxu0 0.0
      %2446 = vmatpush1.msra.mxu0 %v2428
      %2447 = vmatprep.subr.mxu0 0.0
      %2448 = vmatpush1.msra.mxu0 %v2429
      %2449 = vmatprep.subr.mxu0 0.0
      %2450 = vmatpush1.msra.mxu0 %v2430
      %2451 = vmatprep.subr.mxu0 0.0
      %2452 = vmatpush1.msra.mxu0 %v2431
      %2453 = vmatprep.subr.mxu0 0.0
      %2454 = vmatpush1.msra.mxu0 %v2432
      %2455 = vmatprep.subr.mxu0 0.0
      %2456 = vmatpush1.msra.mxu0 %v2433
      %2457 = vmatprep.subr.mxu0 0.0
      %2458 = vmatpush1.msra.mxu0 %v2434
      %2459 = vmatprep.subr.mxu0 0.0
      %2460 = vmatpush1.msra.mxu0 %v2435
      %2461 = vmatprep.subr.mxu0 0.0
      %2462 = vmatpush1.msra.mxu0 %v2436
      %2463 = vmatprep.subr.mxu0 0.0
      %2464 = vmatpush1.msra.mxu0 %v2437
      %2465 = vmatprep.subr.mxu0 0.0
      %2466 = vmatpush1.msra.mxu0 %v2438
      %2467 = vmatprep.subr.mxu0 0.0
      %2468 = vmatpush1.msra.mxu0 %v2439
      %2469 = vmatprep.subr.mxu0 0.0
      %2470 = vmatpush1.msra.mxu0 %v2440
      %2471 = vmatprep.subr.mxu0 0.0
      %2472 = vmatpush1.msra.mxu0 %v2441
      %2473 = vmatprep.subr.mxu0 0.0
      %2474 = vmatpush1.msra.mxu0 %v2442
      %2475 = vmatprep.subr.mxu0 0.0
      %2476 = vmatpush1.msra.mxu0 0.0
      %2477 = vmatprep.subr.mxu0 0.0
      %2478 = vmatpush1.msra.mxu0 0.0
      %2479 = vmatprep.subr.mxu0 0.0
      %2480 = vmatpush1.msra.mxu0 0.0
      %2481 = vmatprep.subr.mxu0 0.0
      %2482 = vmatpush1.msra.mxu0 0.0
      %2483 = vmatprep.subr.mxu0 0.0
      %2484 = vmatpush1.msra.mxu0 0.0
      %2485 = vmatprep.subr.mxu0 0.0
      %2486 = vmatpush1.msra.mxu0 0.0
      %2487 = vmatprep.subr.mxu0 0.0
      %2488 = vmatpush1.msra.mxu0 0.0
      %2489 = vmatprep.subr.mxu0 0.0
      %2490 = vmatpush1.msra.mxu0 0.0
      %2491 = vmatprep.subr.mxu0 0.0
      %2492 = vmatpush1.msra.mxu0 0.0
      %2493 = vmatprep.subr.mxu0 0.0
      %2494 = vmatpush1.msra.mxu0 0.0
      %2495 = vmatprep.subr.mxu0 0.0
      %2496 = vmatpush1.msra.mxu0 0.0
      %2497 = vmatprep.subr.mxu0 0.0
      %2498 = vmatpush1.msra.mxu0 0.0
      %2499 = vmatprep.subr.mxu0 0.0
      %2500 = vmatpush1.msra.mxu0 0.0
      %2501 = vmatprep.subr.mxu0 0.0
      %2502 = vmatpush1.msra.mxu0 0.0
      %2503 = vmatprep.subr.mxu0 0.0
      %2504 = vmatpush1.msra.mxu0 0.0
      %2505 = vmatprep.subr.mxu0 0.0
      %2506 = vmatpush1.msra.mxu0 0.0
      %2507 = vmatprep.mubr.f32.mxu0 0.0
      %2508 = vmatmul.mubr.f32.gmra.mrb[0].mxu0 %v2425
      %v2509 = vpop.f32.mrb[0].mxu0
      %v2510 = vadd.f32 0.0, %v2509
      %v2511 = vpop.f32.mrb[0].mxu0
      %2512 = vmatprep.mubr.f32.mxu0 0.0
      %2513 = vmatmul.mubr.f32.gmra.mrb[0].mxu0 %v2426
      %v2514 = vpop.f32.mrb[0].mxu0
      %v2515 = vadd.f32 0.0, %v2514
      %v2516 = vpop.f32.mrb[0].mxu0
      %2517 = vdwg.mxu0
      %v2518 = vld [vmem:[%s9] sm:$0xff]
      %v2519 = vld [vmem:[%s9 + $0x8] sm:$0xf]
      %2521 = vset.pattern.permute.xlu0 0
      %2522 = vperm.xlu0 %2521, %v2518
      %v2523 = vpop.permute.xlu0 %2522
      %2526 = vset.pattern.permute.xlu0 0
      %2527 = vperm.xlu0 %2526, %v2519
      %v2528 = vpop.permute.xlu0 %2527
      %v2530 = vadd.f32 %v2510, %v2523
      %v2531 = vadd.f32 %v2515, %v2528
      %2532 = vst.msk [vmem:[%s404] sm:$0xff] %vm935, %v2530
      %vm2533 = vcmask 519168
      %2534 = vst.msk [vmem:[%s404 + $0x8] sm:$0xf] %vm2533, %v2531
      %p2535 = scmp.lt.s32.totalorder %s23, 1
      %s2536 = scalar_select %p2535, %s23, 1
      %s2537 = smul.addr %s2536, 2
      %s2538 = smul.addr %s2537, 4
      %s2539 = scalar_lea.vmem %s10, %s2538
      %p2540 = scmp.lt.s32.totalorder %s23, 1
      %s2541 = scalar_select %p2540, %s23, 1
      %s2542 = smul.addr %s2541, 2
      %s2543 = smul.addr %s2542, 8
      %s2544 = scalar_lea.vmem %s11, %s2543
      // Predicated region
      $region61: #{octave_conv2_forward.1} parent=59 // pred_check
        %p2545 = pneg %p256
      $region62: #{octave_conv2_forward.1} parent=59 // pred_check_branch
        %2547 = sbr.rel (%p2545) target = $region64
      $region63: #{octave_conv2_forward.1} parent=59 // pred_region
        _
      $region64: #{octave_conv2_forward.1} parent=59 // pred_fallthru
        _
      // Predicated region
      $region65: #{octave_conv2_forward.1} parent=59 // pred_check
        %p2548 = pneg %p282
      $region66: #{octave_conv2_forward.1} parent=59 // pred_check_branch
        %2550 = sbr.rel (%p2548) target = $region68
      $region67: #{octave_conv2_forward.1} parent=59 // pred_region
        _
      $region68: #{octave_conv2_forward.1} parent=59 // pred_fallthru
        _
    $region60: #{octave_conv2_forward.1} parent=5 // pred_fallthru
      _
    %p2551 = scmp.le.s32.totalorder 2, %s18
    // Predicated region
    $region69: #{octave_conv2_forward.1} parent=5 // pred_check
      %p2552 = pneg %p2551
    $region70: #{octave_conv2_forward.1} parent=5 // pred_check_branch
      %2554 = sbr.rel (%p2552) target = $region72
    $region71: #{octave_conv2_forward.1} parent=5 // pred_region
      %s2555 = ssub.s32 %s18, 2
      // Predicated region
      $region73: #{octave_conv2_forward.1} parent=71 // pred_check
        %p2556 = pneg %p262
      $region74: #{octave_conv2_forward.1} parent=71 // pred_check_branch
        %2558 = sbr.rel (%p2556) target = $region76
      $region75: #{octave_conv2_forward.1} parent=71 // pred_region
        %p2559 = scmp.lt.s32.totalorder %s24, 1
        %s2560 = scalar_select %p2559, %s24, 1
        %s2561 = smul.addr %s2560, 2
        %s2562 = smul.addr %s2561, 4
        %s2563 = scalar_lea.vmem %s10, %s2562
      $region76: #{octave_conv2_forward.1} parent=71 // pred_fallthru
        _
      // Predicated region
      $region77: #{octave_conv2_forward.1} parent=71 // pred_check
        %p2564 = pneg %p288
      $region78: #{octave_conv2_forward.1} parent=71 // pred_check_branch
        %2566 = sbr.rel (%p2564) target = $region80
      $region79: #{octave_conv2_forward.1} parent=71 // pred_region
        %p2567 = scmp.lt.s32.totalorder %s24, 1
        %s2568 = scalar_select %p2567, %s24, 1
        %s2569 = smul.addr %s2568, 2
        %s2570 = smul.addr %s2569, 8
        %s2571 = scalar_lea.vmem %s11, %s2570
      $region80: #{octave_conv2_forward.1} parent=71 // pred_fallthru
        _
    $region72: #{octave_conv2_forward.1} parent=5 // pred_fallthru
      _
  $region6: #{octave_conv2_forward.1} parent=0 // loop_footer
    %s22 = sadd.s32 1, %s18
  $region7: #{octave_conv2_forward.1} parent=0 // loop_footer_branch
    %17 = sbr.rel target = $region3
  $region8: #{octave_conv2_forward.1} parent=0 // loop_exit
    _

</llo_original>
